<compile_context>
chip_gen: v5e
topology: v5e:2x2
jax: 0.10.0
libtpu: 0.0.40
codegen_flags: <defaults>
</compile_context>

<pallas_src>
import functools

import jax
import jax.numpy as jnp
from jax.experimental import pallas as pl
from jax.experimental.pallas import tpu as pltpu


_LANE = 128
_SUBLANE = 8
_VMEM_TILE_BUDGET = 24 * 1024 * 1024   # conservative across v5e / v6e / v7x


def _round_up(x, m):
    return ((x + m - 1) // m) * m


def _pick_row_chunk(b_tile):
    # Largest multiple of 8 (<= 32) that divides b_tile: carries per 128-lane
    # hidden chunk then occupy at most 4 vregs each, leaving room for cur/temps.
    for c in (32, 24, 16, 8):
        if c <= b_tile and b_tile % c == 0:
            return c
    return b_tile


def _lif_chunked(cur_all, mem_ref, spk_ref, *, n_steps, b_tile, h_pad,
                 row_chunk, beta, threshold):
    """Leaky integrate-and-fire recurrence, chunked (rows x 128 lanes), time innermost.

    cur_all: [T_BLK * B_TILE, H_pad] f32 (hoisted fc1 output for the time block).
    mem_ref / spk_ref: [B_TILE, H_pad] f32 VMEM carries (membrane / spike-sum).
    Carries for one chunk stay in vregs across all n_steps and are stored once.
    """
    n_row = b_tile // row_chunk
    n_h = h_pad // _LANE
    for r in range(n_row):
        r0 = r * row_chunk
        for hc in range(n_h):
            h0 = hc * _LANE
            mem = mem_ref[r0:r0 + row_chunk, h0:h0 + _LANE]
            spk = spk_ref[r0:r0 + row_chunk, h0:h0 + _LANE]
            for j in range(n_steps):
                row = j * b_tile + r0
                cur_j = cur_all[row:row + row_chunk, h0:h0 + _LANE]
                # reset-by-subtraction uses the *previous* membrane potential
                mem = beta * mem + cur_j - jnp.where(mem > threshold, threshold, 0.0)
                # spike fires off the *new* membrane potential
                spk = spk + jnp.where(mem > threshold, 1.0, 0.0)
            mem_ref[r0:r0 + row_chunk, h0:h0 + _LANE] = mem
            spk_ref[r0:r0 + row_chunk, h0:h0 + _LANE] = spk


def _snn_kernel(x_ref, w1_ref, b1_ref, w2_ref, b2_ref, out_ref, mem_ref, spk_ref, *,
                beta, threshold, t_real, t_blk, b_tile, h_pad, row_chunk, fold_bias):
    # x_ref : [T_BLK, B_TILE, IN_pad]  (time-major block for this (b, t) grid step)
    # w1_ref: [IN_pad, H_pad]   b1_ref: [1, H_pad] (unused when fold_bias)
    # w2_ref: [H_pad, OUT_pad]  b2_ref: [1, OUT_pad]
    # out_ref: [B_TILE, OUT_pad]; mem_ref / spk_ref: [B_TILE, H_pad] VMEM carries.
    t = pl.program_id(1)
    nt = pl.num_programs(1)

    @pl.when(t == 0)
    def _init():
        mem_ref[...] = jnp.zeros_like(mem_ref)
        spk_ref[...] = jnp.zeros_like(spk_ref)

    # ---- Hoisted input projection: one MXU matmul for the whole time block ----
    x_blk = x_ref[...]                                        # [T_BLK, B_TILE, IN_pad]
    x_flat = x_blk.reshape(t_blk * b_tile, x_blk.shape[-1])   # layout-preserving merge
    cur_all = jnp.dot(x_flat, w1_ref[...],
                      preferred_element_type=jnp.float32)     # [T_BLK*B_TILE, H_pad] f32
    if not fold_bias:
        cur_all = cur_all + b1_ref[...]                       # only when no spare K column

    run = functools.partial(_lif_chunked, cur_all, mem_ref, spk_ref,
                            b_tile=b_tile, h_pad=h_pad, row_chunk=row_chunk,
                            beta=beta, threshold=threshold)

    rem = t_real % t_blk
    if rem == 0:
        run(n_steps=t_blk)
    else:
        # Only the last time tile contains (trailing) padded timesteps; skip them
        # statically there and keep every other tile mask-free.
        @pl.when(t < nt - 1)
        def _full_tile():
            run(n_steps=t_blk)

        @pl.when(t == nt - 1)
        def _last_tile():
            run(n_steps=rem)

    # ---- Finalize: acc == (sum_t spk1_t) @ W2 + T * b2 ; lane-dense store ----
    @pl.when(t == nt - 1)
    def _finalize():
        spk = spk_ref[...].astype(w2_ref.dtype)    # integer-valued <= T (exact in bf16)
        out = jnp.dot(spk, w2_ref[...], preferred_element_type=jnp.float32)
        out_ref[...] = out + jnp.float32(t_real) * b2_ref[...]


def snn_classifier_forward(x_seq, w1, b1, w2, b2, *, beta=0.95, threshold=1.0,
                           compute_dtype=jnp.float32):
    """x_seq: [B, T, IN]; w1: [H, IN]; b1: [H]; w2: [OUT, H]; b2: [OUT].

    compute_dtype controls the dtype of the streamed x and the matmul operands
    (jnp.float32 for exactness, jnp.bfloat16 to halve the dominant HBM stream).
    The LIF recurrence and all accumulators always stay float32.
    """
    B, T, IN = x_seq.shape
    H, OUT = w1.shape[0], w2.shape[0]

    IN_pad = _round_up(IN, _LANE)
    H_pad = _round_up(H, _LANE)
    OUT_pad = _round_up(OUT, _LANE)     # lane-dense output; real OUT sliced out below

    # Batch tile: keep >= 2 batch tiles when B >= 16 so the "parallel" grid axis
    # can be sharded across cores (v7x dual TC / megacore).
    if B < 16:
        B_TILE = _round_up(B, _SUBLANE)
    else:
        B_TILE = min(128, _round_up(-(-B // 2), _SUBLANE))

    cbytes = jnp.dtype(compute_dtype).itemsize
    f32b = 4

    def footprint(t_blk, b_tile):
        x_buf = 2 * t_blk * b_tile * IN_pad * cbytes              # double-buffered x tile
        cur = t_blk * b_tile * H_pad * f32b                       # cur_all temporary
        wgt = 2 * (IN_pad * H_pad + H_pad * OUT_pad) * cbytes     # weights (worst-case 2x)
        bias = 2 * (H_pad + OUT_pad) * f32b
        carry = 2 * b_tile * H_pad * f32b                         # mem + spike-sum carries
        outb = 2 * b_tile * OUT_pad * f32b
        return x_buf + cur + wgt + bias + carry + outb

    # Time block: largest (<= 32, multiple of 8) that fits the VMEM budget.
    T_BLK = min(32, _round_up(T, _SUBLANE))
    while footprint(T_BLK, B_TILE) > _VMEM_TILE_BUDGET and T_BLK > _SUBLANE:
        T_BLK = max(_SUBLANE, _round_up(T_BLK // 2, _SUBLANE))
    while footprint(T_BLK, B_TILE) > _VMEM_TILE_BUDGET and B_TILE > _SUBLANE:
        B_TILE = max(_SUBLANE, _round_up(B_TILE // 2, _SUBLANE))

    B_pad = _round_up(B, B_TILE)
    T_pad = _round_up(T, T_BLK)
    nb = B_pad // B_TILE
    nt = T_pad // T_BLK
    row_chunk = _pick_row_chunk(B_TILE)

    vmem_limit = int(min(max(1.5 * footprint(T_BLK, B_TILE), 32 * 1024 * 1024),
                         96 * 1024 * 1024))

    fold_bias = IN_pad > IN   # spare zero-padded K column exists -> fold b1 into W1

    # ---- Operand padding / relayout (x is made time-major so per-step slices of
    # the hoisted matmul result are contiguous, 8-aligned sublane runs). ----
    x = jnp.asarray(x_seq).astype(compute_dtype)
    x = jnp.pad(x, ((0, B_pad - B), (0, T_pad - T), (0, IN_pad - IN)))
    if fold_bias:
        x = x.at[:, :, IN].set(jnp.asarray(1.0, compute_dtype))  # ones column carries b1
    x_tm = jnp.transpose(x, (1, 0, 2))                           # [T_pad, B_pad, IN_pad]

    w1p = jnp.zeros((IN_pad, H_pad), jnp.float32)
    w1p = w1p.at[:IN, :H].set(jnp.asarray(w1, jnp.float32).T)
    if fold_bias:
        w1p = w1p.at[IN, :H].set(jnp.asarray(b1, jnp.float32))
    w1p = w1p.astype(compute_dtype)

    b1p = jnp.zeros((1, H_pad), jnp.float32)
    if not fold_bias:
        b1p = b1p.at[0, :H].set(jnp.asarray(b1, jnp.float32))

    w2p = jnp.pad(jnp.asarray(w2, jnp.float32).T,
                  ((0, H_pad - H), (0, OUT_pad - OUT))).astype(compute_dtype)
    b2p = jnp.pad(jnp.asarray(b2, jnp.float32).reshape(1, OUT),
                  ((0, 0), (0, OUT_pad - OUT)))

    # Padded hidden lanes stay silent because threshold > 0 (cur = 0 there) and
    # their w2 rows are zero, so they never contribute to the output.
    kernel = functools.partial(
        _snn_kernel, beta=float(beta), threshold=float(threshold),
        t_real=int(T), t_blk=int(T_BLK), b_tile=int(B_TILE),
        h_pad=int(H_pad), row_chunk=int(row_chunk), fold_bias=bool(fold_bias))

    def build_and_run(single_buffer_invariants):
        inv = {}
        if single_buffer_invariants:
            # Invariant operands (constant index map): one pipeline buffer is enough.
            inv = dict(pipeline_mode=pl.Buffered(1))
        grid_spec = pltpu.PrefetchScalarGridSpec(
            num_scalar_prefetch=0,
            grid=(nb, nt),
            in_specs=[
                pl.BlockSpec((T_BLK, B_TILE, IN_pad), lambda b, t: (t, b, 0)),
                pl.BlockSpec((IN_pad, H_pad), lambda b, t: (0, 0), **inv),
                pl.BlockSpec((1, H_pad), lambda b, t: (0, 0), **inv),
                pl.BlockSpec((H_pad, OUT_pad), lambda b, t: (0, 0), **inv),
                pl.BlockSpec((1, OUT_pad), lambda b, t: (0, 0), **inv),
            ],
            out_specs=pl.BlockSpec((B_TILE, OUT_pad), lambda b, t: (b, 0)),
            scratch_shapes=[
                pltpu.VMEM((B_TILE, H_pad), jnp.float32),   # mem1 carry
                pltpu.VMEM((B_TILE, H_pad), jnp.float32),   # spike-sum carry
            ],
        )
        return pl.pallas_call(
            kernel,
            out_shape=jax.ShapeDtypeStruct((B_pad, OUT_pad), jnp.float32),
            grid_spec=grid_spec,
            compiler_params=pltpu.CompilerParams(
                dimension_semantics=("parallel", "arbitrary"),
                vmem_limit_bytes=vmem_limit,
            ),
        )(x_tm, w1p, b1p, w2p, b2p)

    try:
        out_padded = build_and_run(True)
    except Exception:
        # pipeline_mode=pl.Buffered(1) not supported on this jax build: fall back
        # to default double-buffered invariant operands (identical semantics).
        out_padded = build_and_run(False)

    return out_padded[:B, :OUT]


def _reference_forward(x_seq, w1, b1, w2, b2, beta=0.95, threshold=1.0):
    """Pure-JAX reference of the same forward for correctness checking."""
    B, T, _ = x_seq.shape
    H, OUT = w1.shape[0], w2.shape[0]
    hi = jax.lax.Precision.HIGHEST
    mem1 = jnp.zeros((B, H), jnp.float32)
    acc = jnp.zeros((B, OUT), jnp.float32)
    for t in range(T):
        cur1 = jnp.dot(x_seq[:, t, :], w1.T, precision=hi) + b1
        reset = (mem1 > threshold).astype(jnp.float32)
        mem1 = beta * mem1 + cur1 - reset * threshold
        spk1 = (mem1 > threshold).astype(jnp.float32)
        acc = acc + (jnp.dot(spk1, w2.T, precision=hi) + b2)
    return acc


if __name__ == "__main__":
    # Small shapes consistent with the module's forward: [batch, steps, input_size]
    batch, num_steps, input_size, hidden_size, output_size = 2, 8, 16, 32, 2
    beta = 0.95

    key = jax.random.PRNGKey(0)
    kx, kw1, kb1, kw2, kb2 = jax.random.split(key, 5)

    # Deterministic nn.Linear-style uniform(-1/sqrt(fan_in), 1/sqrt(fan_in)) init
    bound1 = 1.0 / jnp.sqrt(jnp.float32(input_size))
    bound2 = 1.0 / jnp.sqrt(jnp.float32(hidden_size))
    w1 = jax.random.uniform(kw1, (hidden_size, input_size), jnp.float32, -bound1, bound1)
    b1 = jax.random.uniform(kb1, (hidden_size,), jnp.float32, -bound1, bound1)
    w2 = jax.random.uniform(kw2, (output_size, hidden_size), jnp.float32, -bound2, bound2)
    b2 = jax.random.uniform(kb2, (output_size,), jnp.float32, -bound2, bound2)

    # Scale inputs so membrane potentials actually cross threshold and spike.
    x_seq = 2.0 * jax.random.uniform(kx, (batch, num_steps, input_size), jnp.float32)

    # Exact (f32) path: must match the pure-JAX reference.
    out = snn_classifier_forward(x_seq, w1, b1, w2, b2, beta=beta)
    out = jax.block_until_ready(out)

    ref = _reference_forward(x_seq, w1, b1, w2, b2, beta=beta)
    assert out.shape == (batch, output_size), out.shape
    assert jnp.allclose(out, ref, atol=1e-4, rtol=1e-4), (out, ref)

    # bf16 fast path (halves the dominant HBM stream on realistic shapes).
    # Membranes within bf16 rounding of the threshold may flip a spike, so only
    # a shape/finite sanity check here rather than a bitwise comparison.
    out_bf16 = snn_classifier_forward(x_seq, w1, b1, w2, b2, beta=beta,
                                      compute_dtype=jnp.bfloat16)
    out_bf16 = jax.block_until_ready(out_bf16)
    assert out_bf16.shape == (batch, output_size)
    assert bool(jnp.all(jnp.isfinite(out_bf16)))

    print("KERNEL_OK")
</pallas_src>

<mosaic_0001>
module attributes {stable_mosaic.version = 11 : i64} {
  func.func @_snn_kernel(%arg0: i32, %arg1: i32, %arg2: memref<8x8x128xf32, #tpu.memory_space<vmem>>, %arg3: memref<128x128xf32, #tpu.memory_space<vmem>>, %arg4: memref<1x128xf32, #tpu.memory_space<vmem>>, %arg5: memref<128x128xf32, #tpu.memory_space<vmem>>, %arg6: memref<1x128xf32, #tpu.memory_space<vmem>>, %arg7: memref<8x128xf32, #tpu.memory_space<vmem>>, %arg8: memref<8x128xf32, #tpu.memory_space<vmem>>, %arg9: memref<8x128xf32, #tpu.memory_space<vmem>>) attributes {dimension_semantics = [#tpu.dimension_semantics<parallel>, #tpu.dimension_semantics<arbitrary>], iteration_bounds = array<i64: 1, 1>, scalar_prefetch = 0 : i64, scratch_operands = 2 : i64, tpu.core_type = #tpu.core_type<tc>, window_params = [{transform_indices = @transform_0, window_bounds = array<i64: 8, 8, 128>}, {pipeline_mode = #tpu.pipeline_mode<synchronous>, transform_indices = @transform_1, window_bounds = array<i64: 128, 128>}, {pipeline_mode = #tpu.pipeline_mode<synchronous>, transform_indices = @transform_2, window_bounds = array<i64: 1, 128>}, {pipeline_mode = #tpu.pipeline_mode<synchronous>, transform_indices = @transform_3, window_bounds = array<i64: 128, 128>}, {pipeline_mode = #tpu.pipeline_mode<synchronous>, transform_indices = @transform_4, window_bounds = array<i64: 1, 128>}, {transform_indices = @transform_5, window_bounds = array<i64: 8, 128>}]} {
    %c0_i32 = arith.constant 0 : i32
    %0 = arith.cmpi eq, %arg1, %c0_i32 : i32
    %1 = arith.extui %0 : i1 to i32
    %c0_i32_0 = arith.constant 0 : i32
    %2 = arith.cmpi ne, %1, %c0_i32_0 : i32
    scf.if %2 {
      %cst_71 = arith.constant 0.000000e+00 : f32
      %142 = vector.broadcast %cst_71 : f32 to vector<8x128xf32>
      %c0_72 = arith.constant 0 : index
      %c0_73 = arith.constant 0 : index
      %143 = vector.load %arg8[%c0_72, %c0_73] : memref<8x128xf32, #tpu.memory_space<vmem>>, vector<8x128xf32>
      tpu.vector_store %arg8[%c0_72, %c0_73], %142 {strides = array<i32>} : memref<8x128xf32, #tpu.memory_space<vmem>>, vector<8x128xf32>,
      %cst_74 = arith.constant 0.000000e+00 : f32
      %144 = vector.broadcast %cst_74 : f32 to vector<8x128xf32>
      %c0_75 = arith.constant 0 : index
      %c0_76 = arith.constant 0 : index
      %145 = vector.load %arg9[%c0_75, %c0_76] : memref<8x128xf32, #tpu.memory_space<vmem>>, vector<8x128xf32>
      tpu.vector_store %arg9[%c0_75, %c0_76], %144 {strides = array<i32>} : memref<8x128xf32, #tpu.memory_space<vmem>>, vector<8x128xf32>,
    } else {
    }
    %c0 = arith.constant 0 : index
    %c0_1 = arith.constant 0 : index
    %c0_2 = arith.constant 0 : index
    %3 = vector.load %arg2[%c0, %c0_1, %c0_2] : memref<8x8x128xf32, #tpu.memory_space<vmem>>, vector<8x8x128xf32>
    %4 = vector.shape_cast %3 : vector<8x8x128xf32> to vector<64x128xf32>
    %c0_3 = arith.constant 0 : index
    %c0_4 = arith.constant 0 : index
    %5 = vector.load %arg3[%c0_3, %c0_4] : memref<128x128xf32, #tpu.memory_space<vmem>>, vector<128x128xf32>
    %cst = arith.constant dense<0.000000e+00> : vector<64x128xf32>
    %6 = tpu.matmul %4, %5, %cst {dimension_numbers = #tpu.dot_dimension_numbers<[1], [0], [0], [1], [0, 0, 1, 1], [], []>} : vector<64x128xf32>, vector<128x128xf32>, vector<64x128xf32> -> vector<64x128xf32>
    %c0_5 = arith.constant 0 : index
    %c0_6 = arith.constant 0 : index
    %7 = vector.load %arg8[%c0_5, %c0_6] : memref<8x128xf32, #tpu.memory_space<vmem>>, vector<8x128xf32>
    %c0_7 = arith.constant 0 : index
    %c0_8 = arith.constant 0 : index
    %8 = vector.load %arg9[%c0_7, %c0_8] : memref<8x128xf32, #tpu.memory_space<vmem>>, vector<8x128xf32>
    %9 = vector.extract_strided_slice %6 {offsets = [0, 0], sizes = [8, 128], strides = [1, 1]} : vector<64x128xf32> to vector<8x128xf32>
    %cst_9 = arith.constant 0.949999988 : f32
    %10 = vector.broadcast %cst_9 : f32 to vector<8x128xf32>
    %11 = arith.mulf %10, %7 : vector<8x128xf32>
    %12 = arith.addf %11, %9 : vector<8x128xf32>
    %cst_10 = arith.constant 1.000000e+00 : f32
    %13 = vector.broadcast %cst_10 : f32 to vector<8x128xf32>
    %14 = arith.cmpf ogt, %7, %13 : vector<8x128xf32>
    %cst_11 = arith.constant 1.000000e+00 : f32
    %cst_12 = arith.constant 0.000000e+00 : f32
    %15 = vector.broadcast %cst_11 : f32 to vector<8x128xf32>
    %16 = vector.broadcast %cst_12 : f32 to vector<8x128xf32>
    %17 = arith.select %14, %15, %16 : vector<8x128xi1>, vector<8x128xf32>
    %18 = arith.subf %12, %17 : vector<8x128xf32>
    %cst_13 = arith.constant 1.000000e+00 : f32
    %19 = vector.broadcast %cst_13 : f32 to vector<8x128xf32>
    %20 = arith.cmpf ogt, %18, %19 : vector<8x128xf32>
    %cst_14 = arith.constant 1.000000e+00 : f32
    %cst_15 = arith.constant 0.000000e+00 : f32
    %21 = vector.broadcast %cst_14 : f32 to vector<8x128xf32>
    %22 = vector.broadcast %cst_15 : f32 to vector<8x128xf32>
    %23 = arith.select %20, %21, %22 : vector<8x128xi1>, vector<8x128xf32>
    %24 = arith.addf %8, %23 : vector<8x128xf32>
    %25 = vector.extract_strided_slice %6 {offsets = [8, 0], sizes = [8, 128], strides = [1, 1]} : vector<64x128xf32> to vector<8x128xf32>
    %cst_16 = arith.constant 0.949999988 : f32
    %26 = vector.broadcast %cst_16 : f32 to vector<8x128xf32>
    %27 = arith.mulf %26, %18 : vector<8x128xf32>
    %28 = arith.addf %27, %25 : vector<8x128xf32>
    %cst_17 = arith.constant 1.000000e+00 : f32
    %29 = vector.broadcast %cst_17 : f32 to vector<8x128xf32>
    %30 = arith.cmpf ogt, %18, %29 : vector<8x128xf32>
    %cst_18 = arith.constant 1.000000e+00 : f32
    %cst_19 = arith.constant 0.000000e+00 : f32
    %31 = vector.broadcast %cst_18 : f32 to vector<8x128xf32>
    %32 = vector.broadcast %cst_19 : f32 to vector<8x128xf32>
    %33 = arith.select %30, %31, %32 : vector<8x128xi1>, vector<8x128xf32>
    %34 = arith.subf %28, %33 : vector<8x128xf32>
    %cst_20 = arith.constant 1.000000e+00 : f32
    %35 = vector.broadcast %cst_20 : f32 to vector<8x128xf32>
    %36 = arith.cmpf ogt, %34, %35 : vector<8x128xf32>
    %cst_21 = arith.constant 1.000000e+00 : f32
    %cst_22 = arith.constant 0.000000e+00 : f32
    %37 = vector.broadcast %cst_21 : f32 to vector<8x128xf32>
    %38 = vector.broadcast %cst_22 : f32 to vector<8x128xf32>
    %39 = arith.select %36, %37, %38 : vector<8x128xi1>, vector<8x128xf32>
    %40 = arith.addf %24, %39 : vector<8x128xf32>
    %41 = vector.extract_strided_slice %6 {offsets = [16, 0], sizes = [8, 128], strides = [1, 1]} : vector<64x128xf32> to vector<8x128xf32>
    %cst_23 = arith.constant 0.949999988 : f32
    %42 = vector.broadcast %cst_23 : f32 to vector<8x128xf32>
    %43 = arith.mulf %42, %34 : vector<8x128xf32>
    %44 = arith.addf %43, %41 : vector<8x128xf32>
    %cst_24 = arith.constant 1.000000e+00 : f32
    %45 = vector.broadcast %cst_24 : f32 to vector<8x128xf32>
    %46 = arith.cmpf ogt, %34, %45 : vector<8x128xf32>
    %cst_25 = arith.constant 1.000000e+00 : f32
    %cst_26 = arith.constant 0.000000e+00 : f32
    %47 = vector.broadcast %cst_25 : f32 to vector<8x128xf32>
    %48 = vector.broadcast %cst_26 : f32 to vector<8x128xf32>
    %49 = arith.select %46, %47, %48 : vector<8x128xi1>, vector<8x128xf32>
    %50 = arith.subf %44, %49 : vector<8x128xf32>
    %cst_27 = arith.constant 1.000000e+00 : f32
    %51 = vector.broadcast %cst_27 : f32 to vector<8x128xf32>
    %52 = arith.cmpf ogt, %50, %51 : vector<8x128xf32>
    %cst_28 = arith.constant 1.000000e+00 : f32
    %cst_29 = arith.constant 0.000000e+00 : f32
    %53 = vector.broadcast %cst_28 : f32 to vector<8x128xf32>
    %54 = vector.broadcast %cst_29 : f32 to vector<8x128xf32>
    %55 = arith.select %52, %53, %54 : vector<8x128xi1>, vector<8x128xf32>
    %56 = arith.addf %40, %55 : vector<8x128xf32>
    %57 = vector.extract_strided_slice %6 {offsets = [24, 0], sizes = [8, 128], strides = [1, 1]} : vector<64x128xf32> to vector<8x128xf32>
    %cst_30 = arith.constant 0.949999988 : f32
    %58 = vector.broadcast %cst_30 : f32 to vector<8x128xf32>
    %59 = arith.mulf %58, %50 : vector<8x128xf32>
    %60 = arith.addf %59, %57 : vector<8x128xf32>
    %cst_31 = arith.constant 1.000000e+00 : f32
    %61 = vector.broadcast %cst_31 : f32 to vector<8x128xf32>
    %62 = arith.cmpf ogt, %50, %61 : vector<8x128xf32>
    %cst_32 = arith.constant 1.000000e+00 : f32
    %cst_33 = arith.constant 0.000000e+00 : f32
    %63 = vector.broadcast %cst_32 : f32 to vector<8x128xf32>
    %64 = vector.broadcast %cst_33 : f32 to vector<8x128xf32>
    %65 = arith.select %62, %63, %64 : vector<8x128xi1>, vector<8x128xf32>
    %66 = arith.subf %60, %65 : vector<8x128xf32>
    %cst_34 = arith.constant 1.000000e+00 : f32
    %67 = vector.broadcast %cst_34 : f32 to vector<8x128xf32>
    %68 = arith.cmpf ogt, %66, %67 : vector<8x128xf32>
    %cst_35 = arith.constant 1.000000e+00 : f32
    %cst_36 = arith.constant 0.000000e+00 : f32
    %69 = vector.broadcast %cst_35 : f32 to vector<8x128xf32>
    %70 = vector.broadcast %cst_36 : f32 to vector<8x128xf32>
    %71 = arith.select %68, %69, %70 : vector<8x128xi1>, vector<8x128xf32>
    %72 = arith.addf %56, %71 : vector<8x128xf32>
    %73 = vector.extract_strided_slice %6 {offsets = [32, 0], sizes = [8, 128], strides = [1, 1]} : vector<64x128xf32> to vector<8x128xf32>
    %cst_37 = arith.constant 0.949999988 : f32
    %74 = vector.broadcast %cst_37 : f32 to vector<8x128xf32>
    %75 = arith.mulf %74, %66 : vector<8x128xf32>
    %76 = arith.addf %75, %73 : vector<8x128xf32>
    %cst_38 = arith.constant 1.000000e+00 : f32
    %77 = vector.broadcast %cst_38 : f32 to vector<8x128xf32>
    %78 = arith.cmpf ogt, %66, %77 : vector<8x128xf32>
    %cst_39 = arith.constant 1.000000e+00 : f32
    %cst_40 = arith.constant 0.000000e+00 : f32
    %79 = vector.broadcast %cst_39 : f32 to vector<8x128xf32>
    %80 = vector.broadcast %cst_40 : f32 to vector<8x128xf32>
    %81 = arith.select %78, %79, %80 : vector<8x128xi1>, vector<8x128xf32>
    %82 = arith.subf %76, %81 : vector<8x128xf32>
    %cst_41 = arith.constant 1.000000e+00 : f32
    %83 = vector.broadcast %cst_41 : f32 to vector<8x128xf32>
    %84 = arith.cmpf ogt, %82, %83 : vector<8x128xf32>
    %cst_42 = arith.constant 1.000000e+00 : f32
    %cst_43 = arith.constant 0.000000e+00 : f32
    %85 = vector.broadcast %cst_42 : f32 to vector<8x128xf32>
    %86 = vector.broadcast %cst_43 : f32 to vector<8x128xf32>
    %87 = arith.select %84, %85, %86 : vector<8x128xi1>, vector<8x128xf32>
    %88 = arith.addf %72, %87 : vector<8x128xf32>
    %89 = vector.extract_strided_slice %6 {offsets = [40, 0], sizes = [8, 128], strides = [1, 1]} : vector<64x128xf32> to vector<8x128xf32>
    %cst_44 = arith.constant 0.949999988 : f32
    %90 = vector.broadcast %cst_44 : f32 to vector<8x128xf32>
    %91 = arith.mulf %90, %82 : vector<8x128xf32>
    %92 = arith.addf %91, %89 : vector<8x128xf32>
    %cst_45 = arith.constant 1.000000e+00 : f32
    %93 = vector.broadcast %cst_45 : f32 to vector<8x128xf32>
    %94 = arith.cmpf ogt, %82, %93 : vector<8x128xf32>
    %cst_46 = arith.constant 1.000000e+00 : f32
    %cst_47 = arith.constant 0.000000e+00 : f32
    %95 = vector.broadcast %cst_46 : f32 to vector<8x128xf32>
    %96 = vector.broadcast %cst_47 : f32 to vector<8x128xf32>
    %97 = arith.select %94, %95, %96 : vector<8x128xi1>, vector<8x128xf32>
    %98 = arith.subf %92, %97 : vector<8x128xf32>
    %cst_48 = arith.constant 1.000000e+00 : f32
    %99 = vector.broadcast %cst_48 : f32 to vector<8x128xf32>
    %100 = arith.cmpf ogt, %98, %99 : vector<8x128xf32>
    %cst_49 = arith.constant 1.000000e+00 : f32
    %cst_50 = arith.constant 0.000000e+00 : f32
    %101 = vector.broadcast %cst_49 : f32 to vector<8x128xf32>
    %102 = vector.broadcast %cst_50 : f32 to vector<8x128xf32>
    %103 = arith.select %100, %101, %102 : vector<8x128xi1>, vector<8x128xf32>
    %104 = arith.addf %88, %103 : vector<8x128xf32>
    %105 = vector.extract_strided_slice %6 {offsets = [48, 0], sizes = [8, 128], strides = [1, 1]} : vector<64x128xf32> to vector<8x128xf32>
    %cst_51 = arith.constant 0.949999988 : f32
    %106 = vector.broadcast %cst_51 : f32 to vector<8x128xf32>
    %107 = arith.mulf %106, %98 : vector<8x128xf32>
    %108 = arith.addf %107, %105 : vector<8x128xf32>
    %cst_52 = arith.constant 1.000000e+00 : f32
    %109 = vector.broadcast %cst_52 : f32 to vector<8x128xf32>
    %110 = arith.cmpf ogt, %98, %109 : vector<8x128xf32>
    %cst_53 = arith.constant 1.000000e+00 : f32
    %cst_54 = arith.constant 0.000000e+00 : f32
    %111 = vector.broadcast %cst_53 : f32 to vector<8x128xf32>
    %112 = vector.broadcast %cst_54 : f32 to vector<8x128xf32>
    %113 = arith.select %110, %111, %112 : vector<8x128xi1>, vector<8x128xf32>
    %114 = arith.subf %108, %113 : vector<8x128xf32>
    %cst_55 = arith.constant 1.000000e+00 : f32
    %115 = vector.broadcast %cst_55 : f32 to vector<8x128xf32>
    %116 = arith.cmpf ogt, %114, %115 : vector<8x128xf32>
    %cst_56 = arith.constant 1.000000e+00 : f32
    %cst_57 = arith.constant 0.000000e+00 : f32
    %117 = vector.broadcast %cst_56 : f32 to vector<8x128xf32>
    %118 = vector.broadcast %cst_57 : f32 to vector<8x128xf32>
    %119 = arith.select %116, %117, %118 : vector<8x128xi1>, vector<8x128xf32>
    %120 = arith.addf %104, %119 : vector<8x128xf32>
    %121 = vector.extract_strided_slice %6 {offsets = [56, 0], sizes = [8, 128], strides = [1, 1]} : vector<64x128xf32> to vector<8x128xf32>
    %cst_58 = arith.constant 0.949999988 : f32
    %122 = vector.broadcast %cst_58 : f32 to vector<8x128xf32>
    %123 = arith.mulf %122, %114 : vector<8x128xf32>
    %124 = arith.addf %123, %121 : vector<8x128xf32>
    %cst_59 = arith.constant 1.000000e+00 : f32
    %125 = vector.broadcast %cst_59 : f32 to vector<8x128xf32>
    %126 = arith.cmpf ogt, %114, %125 : vector<8x128xf32>
    %cst_60 = arith.constant 1.000000e+00 : f32
    %cst_61 = arith.constant 0.000000e+00 : f32
    %127 = vector.broadcast %cst_60 : f32 to vector<8x128xf32>
    %128 = vector.broadcast %cst_61 : f32 to vector<8x128xf32>
    %129 = arith.select %126, %127, %128 : vector<8x128xi1>, vector<8x128xf32>
    %130 = arith.subf %124, %129 : vector<8x128xf32>
    %cst_62 = arith.constant 1.000000e+00 : f32
    %131 = vector.broadcast %cst_62 : f32 to vector<8x128xf32>
    %132 = arith.cmpf ogt, %130, %131 : vector<8x128xf32>
    %cst_63 = arith.constant 1.000000e+00 : f32
    %cst_64 = arith.constant 0.000000e+00 : f32
    %133 = vector.broadcast %cst_63 : f32 to vector<8x128xf32>
    %134 = vector.broadcast %cst_64 : f32 to vector<8x128xf32>
    %135 = arith.select %132, %133, %134 : vector<8x128xi1>, vector<8x128xf32>
    %136 = arith.addf %120, %135 : vector<8x128xf32>
    %c0_65 = arith.constant 0 : index
    %c0_66 = arith.constant 0 : index
    %137 = vector.load %arg8[%c0_65, %c0_66] : memref<8x128xf32, #tpu.memory_space<vmem>>, vector<8x128xf32>
    tpu.vector_store %arg8[%c0_65, %c0_66], %130 {strides = array<i32>} : memref<8x128xf32, #tpu.memory_space<vmem>>, vector<8x128xf32>,
    %c0_67 = arith.constant 0 : index
    %c0_68 = arith.constant 0 : index
    %138 = vector.load %arg9[%c0_67, %c0_68] : memref<8x128xf32, #tpu.memory_space<vmem>>, vector<8x128xf32>
    tpu.vector_store %arg9[%c0_67, %c0_68], %136 {strides = array<i32>} : memref<8x128xf32, #tpu.memory_space<vmem>>, vector<8x128xf32>,
    %c0_i32_69 = arith.constant 0 : i32
    %139 = arith.cmpi eq, %arg1, %c0_i32_69 : i32
    %140 = arith.extui %139 : i1 to i32
    %c0_i32_70 = arith.constant 0 : i32
    %141 = arith.cmpi ne, %140, %c0_i32_70 : i32
    scf.if %141 {
      %c0_71 = arith.constant 0 : index
      %c0_72 = arith.constant 0 : index
      %142 = vector.load %arg9[%c0_71, %c0_72] : memref<8x128xf32, #tpu.memory_space<vmem>>, vector<8x128xf32>
      %c0_73 = arith.constant 0 : index
      %c0_74 = arith.constant 0 : index
      %143 = vector.load %arg5[%c0_73, %c0_74] : memref<128x128xf32, #tpu.memory_space<vmem>>, vector<128x128xf32>
      %cst_75 = arith.constant dense<0.000000e+00> : vector<8x128xf32>
      %144 = tpu.matmul %142, %143, %cst_75 {dimension_numbers = #tpu.dot_dimension_numbers<[1], [0], [0], [1], [0, 0, 1, 1], [], []>} : vector<8x128xf32>, vector<128x128xf32>, vector<8x128xf32> -> vector<8x128xf32>
      %c0_76 = arith.constant 0 : index
      %c0_77 = arith.constant 0 : index
      %145 = vector.load %arg6[%c0_76, %c0_77] : memref<1x128xf32, #tpu.memory_space<vmem>>, vector<1x128xf32>
      %cst_78 = arith.constant 8.000000e+00 : f32
      %146 = vector.broadcast %cst_78 : f32 to vector<1x128xf32>
      %147 = arith.mulf %146, %145 : vector<1x128xf32>
      %148 = vector.broadcast %147 : vector<1x128xf32> to vector<8x128xf32>
      %149 = arith.addf %144, %148 : vector<8x128xf32>
      %c0_79 = arith.constant 0 : index
      %c0_80 = arith.constant 0 : index
      %150 = vector.load %arg7[%c0_79, %c0_80] : memref<8x128xf32, #tpu.memory_space<vmem>>, vector<8x128xf32>
      tpu.vector_store %arg7[%c0_79, %c0_80], %149 {strides = array<i32>} : memref<8x128xf32, #tpu.memory_space<vmem>>, vector<8x128xf32>,
    } else {
    }
    return
  }
  func.func @transform_0(%arg0: i32, %arg1: i32) -> (i32, i32, i32) {
    %c0_i32 = arith.constant 0 : i32
    %c0_i32_0 = arith.constant 0 : i32
    return %arg1, %arg0, %c0_i32 : i32, i32, i32
  }
  func.func @transform_1(%arg0: i32, %arg1: i32) -> (i32, i32) {
    %c0_i32 = arith.constant 0 : i32
    %c0_i32_0 = arith.constant 0 : i32
    %c0_i32_1 = arith.constant 0 : i32
    return %c0_i32, %c0_i32_0 : i32, i32
  }
  func.func @transform_2(%arg0: i32, %arg1: i32) -> (i32, i32) {
    %c0_i32 = arith.constant 0 : i32
    %c0_i32_0 = arith.constant 0 : i32
    %c0_i32_1 = arith.constant 0 : i32
    return %c0_i32, %c0_i32_0 : i32, i32
  }
  func.func @transform_3(%arg0: i32, %arg1: i32) -> (i32, i32) {
    %c0_i32 = arith.constant 0 : i32
    %c0_i32_0 = arith.constant 0 : i32
    %c0_i32_1 = arith.constant 0 : i32
    return %c0_i32, %c0_i32_0 : i32, i32
  }
  func.func @transform_4(%arg0: i32, %arg1: i32) -> (i32, i32) {
    %c0_i32 = arith.constant 0 : i32
    %c0_i32_0 = arith.constant 0 : i32
    %c0_i32_1 = arith.constant 0 : i32
    return %c0_i32, %c0_i32_0 : i32, i32
  }
  func.func @transform_5(%arg0: i32, %arg1: i32) -> (i32, i32) {
    %c0_i32 = arith.constant 0 : i32
    %c0_i32_0 = arith.constant 0 : i32
    return %arg0, %c0_i32 : i32, i32
  }
}

module attributes {stable_mosaic.version = 11 : i64} {
  func.func @_snn_kernel(%arg0: i32, %arg1: i32, %arg2: memref<8x8x128xf32, #tpu.memory_space<vmem>>, %arg3: memref<128x128xf32, #tpu.memory_space<vmem>>, %arg4: memref<1x128xf32, #tpu.memory_space<vmem>>, %arg5: memref<128x128xf32, #tpu.memory_space<vmem>>, %arg6: memref<1x128xf32, #tpu.memory_space<vmem>>, %arg7: memref<8x128xf32, #tpu.memory_space<vmem>>, %arg8: memref<8x128xf32, #tpu.memory_space<vmem>>, %arg9: memref<8x128xf32, #tpu.memory_space<vmem>>) attributes {dimension_semantics = [#tpu.dimension_semantics<parallel>, #tpu.dimension_semantics<arbitrary>], iteration_bounds = array<i64: 1, 1>, scalar_prefetch = 0 : i64, scratch_operands = 2 : i64, tpu.core_type = #tpu.core_type<tc>, window_params = [{transform_indices = @transform_0, window_bounds = array<i64: 8, 8, 128>}, {pipeline_mode = #tpu.pipeline_mode<synchronous>, transform_indices = @transform_1, window_bounds = array<i64: 128, 128>}, {pipeline_mode = #tpu.pipeline_mode<synchronous>, transform_indices = @transform_2, window_bounds = array<i64: 1, 128>}, {pipeline_mode = #tpu.pipeline_mode<synchronous>, transform_indices = @transform_3, window_bounds = array<i64: 128, 128>}, {pipeline_mode = #tpu.pipeline_mode<synchronous>, transform_indices = @transform_4, window_bounds = array<i64: 1, 128>}, {transform_indices = @transform_5, window_bounds = array<i64: 8, 128>}]} {
    %c0_i32 = arith.constant 0 : i32
    %0 = arith.cmpi eq, %arg1, %c0_i32 : i32
    %1 = arith.extui %0 : i1 to i32
    %c0_i32_0 = arith.constant 0 : i32
    %2 = arith.cmpi ne, %1, %c0_i32_0 : i32
    scf.if %2 {
      %cst_71 = arith.constant 0.000000e+00 : f32
      %142 = vector.broadcast %cst_71 : f32 to vector<8x128xf32>
      %c0_72 = arith.constant 0 : index
      %c0_73 = arith.constant 0 : index
      %143 = vector.load %arg8[%c0_72, %c0_73] : memref<8x128xf32, #tpu.memory_space<vmem>>, vector<8x128xf32>
      tpu.vector_store %arg8[%c0_72, %c0_73], %142 {strides = array<i32>} : memref<8x128xf32, #tpu.memory_space<vmem>>, vector<8x128xf32>,
      %cst_74 = arith.constant 0.000000e+00 : f32
      %144 = vector.broadcast %cst_74 : f32 to vector<8x128xf32>
      %c0_75 = arith.constant 0 : index
      %c0_76 = arith.constant 0 : index
      %145 = vector.load %arg9[%c0_75, %c0_76] : memref<8x128xf32, #tpu.memory_space<vmem>>, vector<8x128xf32>
      tpu.vector_store %arg9[%c0_75, %c0_76], %144 {strides = array<i32>} : memref<8x128xf32, #tpu.memory_space<vmem>>, vector<8x128xf32>,
    } else {
    }
    %c0 = arith.constant 0 : index
    %c0_1 = arith.constant 0 : index
    %c0_2 = arith.constant 0 : index
    %3 = vector.load %arg2[%c0, %c0_1, %c0_2] : memref<8x8x128xf32, #tpu.memory_space<vmem>>, vector<8x8x128xf32>
    %4 = vector.shape_cast %3 : vector<8x8x128xf32> to vector<64x128xf32>
    %c0_3 = arith.constant 0 : index
    %c0_4 = arith.constant 0 : index
    %5 = vector.load %arg3[%c0_3, %c0_4] : memref<128x128xf32, #tpu.memory_space<vmem>>, vector<128x128xf32>
    %cst = arith.constant dense<0.000000e+00> : vector<64x128xf32>
    %6 = tpu.matmul %4, %5, %cst {dimension_numbers = #tpu.dot_dimension_numbers<[1], [0], [0], [1], [0, 0, 1, 1], [], []>} : vector<64x128xf32>, vector<128x128xf32>, vector<64x128xf32> -> vector<64x128xf32>
    %c0_5 = arith.constant 0 : index
    %c0_6 = arith.constant 0 : index
    %7 = vector.load %arg8[%c0_5, %c0_6] : memref<8x128xf32, #tpu.memory_space<vmem>>, vector<8x128xf32>
    %c0_7 = arith.constant 0 : index
    %c0_8 = arith.constant 0 : index
    %8 = vector.load %arg9[%c0_7, %c0_8] : memref<8x128xf32, #tpu.memory_space<vmem>>, vector<8x128xf32>
    %9 = vector.extract_strided_slice %6 {offsets = [0, 0], sizes = [8, 128], strides = [1, 1]} : vector<64x128xf32> to vector<8x128xf32>
    %cst_9 = arith.constant 0.949999988 : f32
    %10 = vector.broadcast %cst_9 : f32 to vector<8x128xf32>
    %11 = arith.mulf %10, %7 : vector<8x128xf32>
    %12 = arith.addf %11, %9 : vector<8x128xf32>
    %cst_10 = arith.constant 1.000000e+00 : f32
    %13 = vector.broadcast %cst_10 : f32 to vector<8x128xf32>
    %14 = arith.cmpf ogt, %7, %13 : vector<8x128xf32>
    %cst_11 = arith.constant 1.000000e+00 : f32
    %cst_12 = arith.constant 0.000000e+00 : f32
    %15 = vector.broadcast %cst_11 : f32 to vector<8x128xf32>
    %16 = vector.broadcast %cst_12 : f32 to vector<8x128xf32>
    %17 = arith.select %14, %15, %16 : vector<8x128xi1>, vector<8x128xf32>
    %18 = arith.subf %12, %17 : vector<8x128xf32>
    %cst_13 = arith.constant 1.000000e+00 : f32
    %19 = vector.broadcast %cst_13 : f32 to vector<8x128xf32>
    %20 = arith.cmpf ogt, %18, %19 : vector<8x128xf32>
    %cst_14 = arith.constant 1.000000e+00 : f32
    %cst_15 = arith.constant 0.000000e+00 : f32
    %21 = vector.broadcast %cst_14 : f32 to vector<8x128xf32>
    %22 = vector.broadcast %cst_15 : f32 to vector<8x128xf32>
    %23 = arith.select %20, %21, %22 : vector<8x128xi1>, vector<8x128xf32>
    %24 = arith.addf %8, %23 : vector<8x128xf32>
    %25 = vector.extract_strided_slice %6 {offsets = [8, 0], sizes = [8, 128], strides = [1, 1]} : vector<64x128xf32> to vector<8x128xf32>
    %cst_16 = arith.constant 0.949999988 : f32
    %26 = vector.broadcast %cst_16 : f32 to vector<8x128xf32>
    %27 = arith.mulf %26, %18 : vector<8x128xf32>
    %28 = arith.addf %27, %25 : vector<8x128xf32>
    %cst_17 = arith.constant 1.000000e+00 : f32
    %29 = vector.broadcast %cst_17 : f32 to vector<8x128xf32>
    %30 = arith.cmpf ogt, %18, %29 : vector<8x128xf32>
    %cst_18 = arith.constant 1.000000e+00 : f32
    %cst_19 = arith.constant 0.000000e+00 : f32
    %31 = vector.broadcast %cst_18 : f32 to vector<8x128xf32>
    %32 = vector.broadcast %cst_19 : f32 to vector<8x128xf32>
    %33 = arith.select %30, %31, %32 : vector<8x128xi1>, vector<8x128xf32>
    %34 = arith.subf %28, %33 : vector<8x128xf32>
    %cst_20 = arith.constant 1.000000e+00 : f32
    %35 = vector.broadcast %cst_20 : f32 to vector<8x128xf32>
    %36 = arith.cmpf ogt, %34, %35 : vector<8x128xf32>
    %cst_21 = arith.constant 1.000000e+00 : f32
    %cst_22 = arith.constant 0.000000e+00 : f32
    %37 = vector.broadcast %cst_21 : f32 to vector<8x128xf32>
    %38 = vector.broadcast %cst_22 : f32 to vector<8x128xf32>
    %39 = arith.select %36, %37, %38 : vector<8x128xi1>, vector<8x128xf32>
    %40 = arith.addf %24, %39 : vector<8x128xf32>
    %41 = vector.extract_strided_slice %6 {offsets = [16, 0], sizes = [8, 128], strides = [1, 1]} : vector<64x128xf32> to vector<8x128xf32>
    %cst_23 = arith.constant 0.949999988 : f32
    %42 = vector.broadcast %cst_23 : f32 to vector<8x128xf32>
    %43 = arith.mulf %42, %34 : vector<8x128xf32>
    %44 = arith.addf %43, %41 : vector<8x128xf32>
    %cst_24 = arith.constant 1.000000e+00 : f32
    %45 = vector.broadcast %cst_24 : f32 to vector<8x128xf32>
    %46 = arith.cmpf ogt, %34, %45 : vector<8x128xf32>
    %cst_25 = arith.constant 1.000000e+00 : f32
    %cst_26 = arith.constant 0.000000e+00 : f32
    %47 = vector.broadcast %cst_25 : f32 to vector<8x128xf32>
    %48 = vector.broadcast %cst_26 : f32 to vector<8x128xf32>
    %49 = arith.select %46, %47, %48 : vector<8x128xi1>, vector<8x128xf32>
    %50 = arith.subf %44, %49 : vector<8x128xf32>
    %cst_27 = arith.constant 1.000000e+00 : f32
    %51 = vector.broadcast %cst_27 : f32 to vector<8x128xf32>
    %52 = arith.cmpf ogt, %50, %51 : vector<8x128xf32>
    %cst_28 = arith.constant 1.000000e+00 : f32
    %cst_29 = arith.constant 0.000000e+00 : f32
    %53 = vector.broadcast %cst_28 : f32 to vector<8x128xf32>
    %54 = vector.broadcast %cst_29 : f32 to vector<8x128xf32>
    %55 = arith.select %52, %53, %54 : vector<8x128xi1>, vector<8x128xf32>
    %56 = arith.addf %40, %55 : vector<8x128xf32>
    %57 = vector.extract_strided_slice %6 {offsets = [24, 0], sizes = [8, 128], strides = [1, 1]} : vector<64x128xf32> to vector<8x128xf32>
    %cst_30 = arith.constant 0.949999988 : f32
    %58 = vector.broadcast %cst_30 : f32 to vector<8x128xf32>
    %59 = arith.mulf %58, %50 : vector<8x128xf32>
    %60 = arith.addf %59, %57 : vector<8x128xf32>
    %cst_31 = arith.constant 1.000000e+00 : f32
    %61 = vector.broadcast %cst_31 : f32 to vector<8x128xf32>
    %62 = arith.cmpf ogt, %50, %61 : vector<8x128xf32>
    %cst_32 = arith.constant 1.000000e+00 : f32
    %cst_33 = arith.constant 0.000000e+00 : f32
    %63 = vector.broadcast %cst_32 : f32 to vector<8x128xf32>
    %64 = vector.broadcast %cst_33 : f32 to vector<8x128xf32>
    %65 = arith.select %62, %63, %64 : vector<8x128xi1>, vector<8x128xf32>
    %66 = arith.subf %60, %65 : vector<8x128xf32>
    %cst_34 = arith.constant 1.000000e+00 : f32
    %67 = vector.broadcast %cst_34 : f32 to vector<8x128xf32>
    %68 = arith.cmpf ogt, %66, %67 : vector<8x128xf32>
    %cst_35 = arith.constant 1.000000e+00 : f32
    %cst_36 = arith.constant 0.000000e+00 : f32
    %69 = vector.broadcast %cst_35 : f32 to vector<8x128xf32>
    %70 = vector.broadcast %cst_36 : f32 to vector<8x128xf32>
    %71 = arith.select %68, %69, %70 : vector<8x128xi1>, vector<8x128xf32>
    %72 = arith.addf %56, %71 : vector<8x128xf32>
    %73 = vector.extract_strided_slice %6 {offsets = [32, 0], sizes = [8, 128], strides = [1, 1]} : vector<64x128xf32> to vector<8x128xf32>
    %cst_37 = arith.constant 0.949999988 : f32
    %74 = vector.broadcast %cst_37 : f32 to vector<8x128xf32>
    %75 = arith.mulf %74, %66 : vector<8x128xf32>
    %76 = arith.addf %75, %73 : vector<8x128xf32>
    %cst_38 = arith.constant 1.000000e+00 : f32
    %77 = vector.broadcast %cst_38 : f32 to vector<8x128xf32>
    %78 = arith.cmpf ogt, %66, %77 : vector<8x128xf32>
    %cst_39 = arith.constant 1.000000e+00 : f32
    %cst_40 = arith.constant 0.000000e+00 : f32
    %79 = vector.broadcast %cst_39 : f32 to vector<8x128xf32>
    %80 = vector.broadcast %cst_40 : f32 to vector<8x128xf32>
    %81 = arith.select %78, %79, %80 : vector<8x128xi1>, vector<8x128xf32>
    %82 = arith.subf %76, %81 : vector<8x128xf32>
    %cst_41 = arith.constant 1.000000e+00 : f32
    %83 = vector.broadcast %cst_41 : f32 to vector<8x128xf32>
    %84 = arith.cmpf ogt, %82, %83 : vector<8x128xf32>
    %cst_42 = arith.constant 1.000000e+00 : f32
    %cst_43 = arith.constant 0.000000e+00 : f32
    %85 = vector.broadcast %cst_42 : f32 to vector<8x128xf32>
    %86 = vector.broadcast %cst_43 : f32 to vector<8x128xf32>
    %87 = arith.select %84, %85, %86 : vector<8x128xi1>, vector<8x128xf32>
    %88 = arith.addf %72, %87 : vector<8x128xf32>
    %89 = vector.extract_strided_slice %6 {offsets = [40, 0], sizes = [8, 128], strides = [1, 1]} : vector<64x128xf32> to vector<8x128xf32>
    %cst_44 = arith.constant 0.949999988 : f32
    %90 = vector.broadcast %cst_44 : f32 to vector<8x128xf32>
    %91 = arith.mulf %90, %82 : vector<8x128xf32>
    %92 = arith.addf %91, %89 : vector<8x128xf32>
    %cst_45 = arith.constant 1.000000e+00 : f32
    %93 = vector.broadcast %cst_45 : f32 to vector<8x128xf32>
    %94 = arith.cmpf ogt, %82, %93 : vector<8x128xf32>
    %cst_46 = arith.constant 1.000000e+00 : f32
    %cst_47 = arith.constant 0.000000e+00 : f32
    %95 = vector.broadcast %cst_46 : f32 to vector<8x128xf32>
    %96 = vector.broadcast %cst_47 : f32 to vector<8x128xf32>
    %97 = arith.select %94, %95, %96 : vector<8x128xi1>, vector<8x128xf32>
    %98 = arith.subf %92, %97 : vector<8x128xf32>
    %cst_48 = arith.constant 1.000000e+00 : f32
    %99 = vector.broadcast %cst_48 : f32 to vector<8x128xf32>
    %100 = arith.cmpf ogt, %98, %99 : vector<8x128xf32>
    %cst_49 = arith.constant 1.000000e+00 : f32
    %cst_50 = arith.constant 0.000000e+00 : f32
    %101 = vector.broadcast %cst_49 : f32 to vector<8x128xf32>
    %102 = vector.broadcast %cst_50 : f32 to vector<8x128xf32>
    %103 = arith.select %100, %101, %102 : vector<8x128xi1>, vector<8x128xf32>
    %104 = arith.addf %88, %103 : vector<8x128xf32>
    %105 = vector.extract_strided_slice %6 {offsets = [48, 0], sizes = [8, 128], strides = [1, 1]} : vector<64x128xf32> to vector<8x128xf32>
    %cst_51 = arith.constant 0.949999988 : f32
    %106 = vector.broadcast %cst_51 : f32 to vector<8x128xf32>
    %107 = arith.mulf %106, %98 : vector<8x128xf32>
    %108 = arith.addf %107, %105 : vector<8x128xf32>
    %cst_52 = arith.constant 1.000000e+00 : f32
    %109 = vector.broadcast %cst_52 : f32 to vector<8x128xf32>
    %110 = arith.cmpf ogt, %98, %109 : vector<8x128xf32>
    %cst_53 = arith.constant 1.000000e+00 : f32
    %cst_54 = arith.constant 0.000000e+00 : f32
    %111 = vector.broadcast %cst_53 : f32 to vector<8x128xf32>
    %112 = vector.broadcast %cst_54 : f32 to vector<8x128xf32>
    %113 = arith.select %110, %111, %112 : vector<8x128xi1>, vector<8x128xf32>
    %114 = arith.subf %108, %113 : vector<8x128xf32>
    %cst_55 = arith.constant 1.000000e+00 : f32
    %115 = vector.broadcast %cst_55 : f32 to vector<8x128xf32>
    %116 = arith.cmpf ogt, %114, %115 : vector<8x128xf32>
    %cst_56 = arith.constant 1.000000e+00 : f32
    %cst_57 = arith.constant 0.000000e+00 : f32
    %117 = vector.broadcast %cst_56 : f32 to vector<8x128xf32>
    %118 = vector.broadcast %cst_57 : f32 to vector<8x128xf32>
    %119 = arith.select %116, %117, %118 : vector<8x128xi1>, vector<8x128xf32>
    %120 = arith.addf %104, %119 : vector<8x128xf32>
    %121 = vector.extract_strided_slice %6 {offsets = [56, 0], sizes = [8, 128], strides = [1, 1]} : vector<64x128xf32> to vector<8x128xf32>
    %cst_58 = arith.constant 0.949999988 : f32
    %122 = vector.broadcast %cst_58 : f32 to vector<8x128xf32>
    %123 = arith.mulf %122, %114 : vector<8x128xf32>
    %124 = arith.addf %123, %121 : vector<8x128xf32>
    %cst_59 = arith.constant 1.000000e+00 : f32
    %125 = vector.broadcast %cst_59 : f32 to vector<8x128xf32>
    %126 = arith.cmpf ogt, %114, %125 : vector<8x128xf32>
    %cst_60 = arith.constant 1.000000e+00 : f32
    %cst_61 = arith.constant 0.000000e+00 : f32
    %127 = vector.broadcast %cst_60 : f32 to vector<8x128xf32>
    %128 = vector.broadcast %cst_61 : f32 to vector<8x128xf32>
    %129 = arith.select %126, %127, %128 : vector<8x128xi1>, vector<8x128xf32>
    %130 = arith.subf %124, %129 : vector<8x128xf32>
    %cst_62 = arith.constant 1.000000e+00 : f32
    %131 = vector.broadcast %cst_62 : f32 to vector<8x128xf32>
    %132 = arith.cmpf ogt, %130, %131 : vector<8x128xf32>
    %cst_63 = arith.constant 1.000000e+00 : f32
    %cst_64 = arith.constant 0.000000e+00 : f32
    %133 = vector.broadcast %cst_63 : f32 to vector<8x128xf32>
    %134 = vector.broadcast %cst_64 : f32 to vector<8x128xf32>
    %135 = arith.select %132, %133, %134 : vector<8x128xi1>, vector<8x128xf32>
    %136 = arith.addf %120, %135 : vector<8x128xf32>
    %c0_65 = arith.constant 0 : index
    %c0_66 = arith.constant 0 : index
    %137 = vector.load %arg8[%c0_65, %c0_66] : memref<8x128xf32, #tpu.memory_space<vmem>>, vector<8x128xf32>
    tpu.vector_store %arg8[%c0_65, %c0_66], %130 {strides = array<i32>} : memref<8x128xf32, #tpu.memory_space<vmem>>, vector<8x128xf32>,
    %c0_67 = arith.constant 0 : index
    %c0_68 = arith.constant 0 : index
    %138 = vector.load %arg9[%c0_67, %c0_68] : memref<8x128xf32, #tpu.memory_space<vmem>>, vector<8x128xf32>
    tpu.vector_store %arg9[%c0_67, %c0_68], %136 {strides = array<i32>} : memref<8x128xf32, #tpu.memory_space<vmem>>, vector<8x128xf32>,
    %c0_i32_69 = arith.constant 0 : i32
    %139 = arith.cmpi eq, %arg1, %c0_i32_69 : i32
    %140 = arith.extui %139 : i1 to i32
    %c0_i32_70 = arith.constant 0 : i32
    %141 = arith.cmpi ne, %140, %c0_i32_70 : i32
    scf.if %141 {
      %c0_71 = arith.constant 0 : index
      %c0_72 = arith.constant 0 : index
      %142 = vector.load %arg9[%c0_71, %c0_72] : memref<8x128xf32, #tpu.memory_space<vmem>>, vector<8x128xf32>
      %c0_73 = arith.constant 0 : index
      %c0_74 = arith.constant 0 : index
      %143 = vector.load %arg5[%c0_73, %c0_74] : memref<128x128xf32, #tpu.memory_space<vmem>>, vector<128x128xf32>
      %cst_75 = arith.constant dense<0.000000e+00> : vector<8x128xf32>
      %144 = tpu.matmul %142, %143, %cst_75 {dimension_numbers = #tpu.dot_dimension_numbers<[1], [0], [0], [1], [0, 0, 1, 1], [], []>} : vector<8x128xf32>, vector<128x128xf32>, vector<8x128xf32> -> vector<8x128xf32>
      %c0_76 = arith.constant 0 : index
      %c0_77 = arith.constant 0 : index
      %145 = vector.load %arg6[%c0_76, %c0_77] : memref<1x128xf32, #tpu.memory_space<vmem>>, vector<1x128xf32>
      %cst_78 = arith.constant 8.000000e+00 : f32
      %146 = vector.broadcast %cst_78 : f32 to vector<1x128xf32>
      %147 = arith.mulf %146, %145 : vector<1x128xf32>
      %148 = vector.broadcast %147 : vector<1x128xf32> to vector<8x128xf32>
      %149 = arith.addf %144, %148 : vector<8x128xf32>
      %c0_79 = arith.constant 0 : index
      %c0_80 = arith.constant 0 : index
      %150 = vector.load %arg7[%c0_79, %c0_80] : memref<8x128xf32, #tpu.memory_space<vmem>>, vector<8x128xf32>
      tpu.vector_store %arg7[%c0_79, %c0_80], %149 {strides = array<i32>} : memref<8x128xf32, #tpu.memory_space<vmem>>, vector<8x128xf32>,
    } else {
    }
    return
  }
  func.func @transform_0(%arg0: i32, %arg1: i32) -> (i32, i32, i32) {
    %c0_i32 = arith.constant 0 : i32
    %c0_i32_0 = arith.constant 0 : i32
    return %arg1, %arg0, %c0_i32 : i32, i32, i32
  }
  func.func @transform_1(%arg0: i32, %arg1: i32) -> (i32, i32) {
    %c0_i32 = arith.constant 0 : i32
    %c0_i32_0 = arith.constant 0 : i32
    %c0_i32_1 = arith.constant 0 : i32
    return %c0_i32, %c0_i32_0 : i32, i32
  }
  func.func @transform_2(%arg0: i32, %arg1: i32) -> (i32, i32) {
    %c0_i32 = arith.constant 0 : i32
    %c0_i32_0 = arith.constant 0 : i32
    %c0_i32_1 = arith.constant 0 : i32
    return %c0_i32, %c0_i32_0 : i32, i32
  }
  func.func @transform_3(%arg0: i32, %arg1: i32) -> (i32, i32) {
    %c0_i32 = arith.constant 0 : i32
    %c0_i32_0 = arith.constant 0 : i32
    %c0_i32_1 = arith.constant 0 : i32
    return %c0_i32, %c0_i32_0 : i32, i32
  }
  func.func @transform_4(%arg0: i32, %arg1: i32) -> (i32, i32) {
    %c0_i32 = arith.constant 0 : i32
    %c0_i32_0 = arith.constant 0 : i32
    %c0_i32_1 = arith.constant 0 : i32
    return %c0_i32, %c0_i32_0 : i32, i32
  }
  func.func @transform_5(%arg0: i32, %arg1: i32) -> (i32, i32) {
    %c0_i32 = arith.constant 0 : i32
    %c0_i32_0 = arith.constant 0 : i32
    return %arg0, %c0_i32 : i32, i32
  }
}

</mosaic_0001>

<llo_original>
// kernel: tpu_custom_call.1
$region0: #{tpu_custom_call.1}
  #allocation0 [shape = 'u32[]', space=smem, size = 0x4, offset = 0x4, fixed_abs, tag = 'smem constant byte address 0x4 - core index']
  #allocation1 [shape = 'u32[72,128]{1,0:T(1,128)}', space=vmem, size = 0x9000, scoped, tag = 'internal scratch']
  #allocation2 [shape = 'f32[8,128]{1,0:T(8,128)}', space=vmem, size = 0x1000, scoped, tag = 'scratch operand']
  #allocation3 [shape = 'f32[8,128]{1,0:T(8,128)}', space=vmem, size = 0x1000, scoped, tag = 'scratch operand']
  %s0 = inlined_call_operand.hbm [shape: f32[8,8,128], index: 0, kind: input, shape index: {}]
  %s1 = inlined_call_operand.hbm [shape: f32[128,128], index: 1, kind: input, shape index: {}]
  %s2 = inlined_call_operand.vmem [shape: f32[1,128], index: 2, kind: input, shape index: {}]
  %s3 = inlined_call_operand.hbm [shape: f32[128,128], index: 3, kind: input, shape index: {}]
  %s4 = inlined_call_operand.vmem [shape: f32[1,128], index: 4, kind: input, shape index: {}]
  %s5 = inlined_call_operand.hbm [shape: f32[8,128], index: 5, kind: output, shape index: {}]
  %s6 = sld [smem:[#allocation0]]
  $region50: #{tpu_custom_call.1} parent=0
    _
  %s8 = ssub.s32 1, %s6
  %s9 = scalar_select 0, %s8, %s6
  $region1: #{tpu_custom_call.1} parent=0
    #allocation4 [shape = 'u8[32768]{0}', space=vmem, size = 0x8000, scoped, tag = 'input window, operand 0, single buffered']
    #allocation5 [shape = 's32[1]{0}', space=sflag, size = 0x4, scoped, tag = 'scoped memory for tpu_custom_call.1']
    #allocation6 [shape = 's32[1]{0}', space=sflag, size = 0x4, scoped, tag = 'scoped memory for tpu_custom_call.1']
    #allocation7 [shape = 'u8[65536]{0}', space=vmem, size = 0x10000, scoped, tag = 'input window, operand 1, single buffered']
    #allocation8 [shape = 's32[1]{0}', space=sflag, size = 0x4, scoped, tag = 'scoped memory for tpu_custom_call.1']
    #allocation9 [shape = 'u8[65536]{0}', space=vmem, size = 0x10000, scoped, tag = 'input window, operand 3, single buffered']
    #allocation10 [shape = 'u8[4096]{0}', space=vmem, size = 0x1000, scoped, tag = 'output window, operand 0, single buffered']
    %10 = vsyncpa [#allocation5], 0
    %11 = vsyncpa [#allocation8], 0
    %12 = vsyncpa [#allocation6], 0
    // Predicated region
    $region2: #{tpu_custom_call.1} parent=1 // pred_check
      _
    $region3: #{tpu_custom_call.1} parent=1 // pred_check_branch
      %14 = sbr.rel (0) target = $region5
    $region4: #{tpu_custom_call.1} parent=1 // pred_region
      %16 = vsyncadd [#allocation5], 0
      %s17 = sshll.u32 %s0, 4
      %s18 = int_to_ptr.hbm [resolvable:$true] %s17
      %s19 = sshll.u32 [#allocation4], 4
      %s20 = int_to_ptr.vmem [resolvable:$true] %s19
      %25 = dma.hbm_to_vmem [thread:$0]  %s18, 1024, %s20, [#allocation5], 128, 128, 8
    $region5: #{tpu_custom_call.1} parent=1 // pred_fallthru
      _
    // Predicated region
    $region6: #{tpu_custom_call.1} parent=1 // pred_check
      _
    $region7: #{tpu_custom_call.1} parent=1 // pred_check_branch
      %27 = sbr.rel (0) target = $region9
    $region8: #{tpu_custom_call.1} parent=1 // pred_region
      %29 = vsyncadd [#allocation8], 0
      %s30 = sshll.u32 %s1, 4
      %s31 = int_to_ptr.hbm [resolvable:$true] %s30
      %s32 = sshll.u32 [#allocation7], 4
      %s33 = int_to_ptr.vmem [resolvable:$true] %s32
      %38 = dma.hbm_to_vmem [thread:$0]  %s31, 2048, %s33, [#allocation8], 128, 128, 8
    $region9: #{tpu_custom_call.1} parent=1 // pred_fallthru
      _
    // Predicated region
    $region10: #{tpu_custom_call.1} parent=1 // pred_check
      _
    $region11: #{tpu_custom_call.1} parent=1 // pred_check_branch
      %40 = sbr.rel (0) target = $region13
    $region12: #{tpu_custom_call.1} parent=1 // pred_region
      _
    $region13: #{tpu_custom_call.1} parent=1 // pred_fallthru
      _
    // Predicated region
    $region14: #{tpu_custom_call.1} parent=1 // pred_check
      _
    $region15: #{tpu_custom_call.1} parent=1 // pred_check_branch
      %42 = sbr.rel (0) target = $region17
    $region16: #{tpu_custom_call.1} parent=1 // pred_region
      %44 = vsyncadd [#allocation8], 0
      %s45 = sshll.u32 %s3, 4
      %s46 = int_to_ptr.hbm [resolvable:$true] %s45
      %s47 = sshll.u32 [#allocation9], 4
      %s48 = int_to_ptr.vmem [resolvable:$true] %s47
      %53 = dma.hbm_to_vmem [thread:$0]  %s46, 2048, %s48, [#allocation8], 128, 128, 8
    $region17: #{tpu_custom_call.1} parent=1 // pred_fallthru
      _
    // Predicated region
    $region18: #{tpu_custom_call.1} parent=1 // pred_check
      _
    $region19: #{tpu_custom_call.1} parent=1 // pred_check_branch
      %55 = sbr.rel (0) target = $region21
    $region20: #{tpu_custom_call.1} parent=1 // pred_region
      _
    $region21: #{tpu_custom_call.1} parent=1 // pred_fallthru
      _
    // Predicated region
    $region22: #{tpu_custom_call.1} parent=1 // pred_check
      _
    $region23: #{tpu_custom_call.1} parent=1 // pred_check_branch
      %57 = sbr.rel (0) target = $region25
    $region24: #{tpu_custom_call.1} parent=1 // pred_region
      %59 = dma.done [#allocation5], 1024
    $region25: #{tpu_custom_call.1} parent=1 // pred_fallthru
      _
    // Predicated region
    $region26: #{tpu_custom_call.1} parent=1 // pred_check
      _
    $region27: #{tpu_custom_call.1} parent=1 // pred_check_branch
      %61 = sbr.rel (0) target = $region29
    $region28: #{tpu_custom_call.1} parent=1 // pred_region
      %63 = dma.done [#allocation8], 2048
    $region29: #{tpu_custom_call.1} parent=1 // pred_fallthru
      _
    // Predicated region
    $region30: #{tpu_custom_call.1} parent=1 // pred_check
      _
    $region31: #{tpu_custom_call.1} parent=1 // pred_check_branch
      %65 = sbr.rel (0) target = $region33
    $region32: #{tpu_custom_call.1} parent=1 // pred_region
      %67 = dma.done [#allocation8], 2048
    $region33: #{tpu_custom_call.1} parent=1 // pred_fallthru
      _
    %p68 = scmp.eq.s32.totalorder 0, 0
    // Predicated region
    $region34: #{tpu_custom_call.1} parent=1 // pred_check
      %p69 = pneg %p68
    $region35: #{tpu_custom_call.1} parent=1 // pred_check_branch
      %71 = sbr.rel (%p69) target = $region37
    $region36: #{tpu_custom_call.1} parent=1 // pred_region
      %72 = vst [vmem:[#allocation2] sm:$0xff] 0.0
      %73 = vst [vmem:[#allocation3] sm:$0xff] 0.0
    $region37: #{tpu_custom_call.1} parent=1 // pred_fallthru
      _
    %v74 = vld [vmem:[#allocation4] sm:$0xff]
    %v75 = vld [vmem:[#allocation4 + $0x8] sm:$0xff]
    %v76 = vld [vmem:[#allocation4 + $0x10] sm:$0xff]
    %v77 = vld [vmem:[#allocation4 + $0x18] sm:$0xff]
    %v78 = vld [vmem:[#allocation4 + $0x20] sm:$0xff]
    %v79 = vld [vmem:[#allocation4 + $0x28] sm:$0xff]
    %v80 = vld [vmem:[#allocation4 + $0x30] sm:$0xff]
    %v81 = vld [vmem:[#allocation4 + $0x38] sm:$0xff]
    %v82 = vld [vmem:[#allocation7] sm:$0xff]
    %v83 = vld [vmem:[#allocation7 + $0x8] sm:$0xff]
    %v84 = vld [vmem:[#allocation7 + $0x10] sm:$0xff]
    %v85 = vld [vmem:[#allocation7 + $0x18] sm:$0xff]
    %v86 = vld [vmem:[#allocation7 + $0x20] sm:$0xff]
    %v87 = vld [vmem:[#allocation7 + $0x28] sm:$0xff]
    %v88 = vld [vmem:[#allocation7 + $0x30] sm:$0xff]
    %v89 = vld [vmem:[#allocation7 + $0x38] sm:$0xff]
    %v90 = vld [vmem:[#allocation7 + $0x40] sm:$0xff]
    %v91 = vld [vmem:[#allocation7 + $0x48] sm:$0xff]
    %v92 = vld [vmem:[#allocation7 + $0x50] sm:$0xff]
    %v93 = vld [vmem:[#allocation7 + $0x58] sm:$0xff]
    %v94 = vld [vmem:[#allocation7 + $0x60] sm:$0xff]
    %v95 = vld [vmem:[#allocation7 + $0x68] sm:$0xff]
    %v96 = vld [vmem:[#allocation7 + $0x70] sm:$0xff]
    %v97 = vld [vmem:[#allocation7 + $0x78] sm:$0xff]
    %98 = vmatpush.msra.mxu0 %v97
    %99 = vmatpush.msra.mxu0 %v96
    %100 = vmatpush.msra.mxu0 %v95
    %101 = vmatpush.msra.mxu0 %v94
    %102 = vmatpush.msra.mxu0 %v93
    %103 = vmatpush.msra.mxu0 %v92
    %104 = vmatpush.msra.mxu0 %v91
    %105 = vmatpush.msra.mxu0 %v90
    %106 = vmatpush.msra.mxu0 %v89
    %107 = vmatpush.msra.mxu0 %v88
    %108 = vmatpush.msra.mxu0 %v87
    %109 = vmatpush.msra.mxu0 %v86
    %110 = vmatpush.msra.mxu0 %v85
    %111 = vmatpush.msra.mxu0 %v84
    %112 = vmatpush.msra.mxu0 %v83
    %113 = vmatpush.msra.mxu0 %v82
    %114 = vmatmul.f32.gmra.mxu0 %v74
    %v115 = vpop.f32.mrf.mxu0
    %v116 = vadd.f32 0.0, %v115
    %117 = vmatmul.f32.gmra.mxu0 %v75
    %v118 = vpop.f32.mrf.mxu0
    %v119 = vadd.f32 0.0, %v118
    %120 = vmatmul.f32.gmra.mxu0 %v76
    %v121 = vpop.f32.mrf.mxu0
    %v122 = vadd.f32 0.0, %v121
    %123 = vmatmul.f32.gmra.mxu0 %v77
    %v124 = vpop.f32.mrf.mxu0
    %v125 = vadd.f32 0.0, %v124
    %126 = vmatmul.f32.gmra.mxu0 %v78
    %v127 = vpop.f32.mrf.mxu0
    %v128 = vadd.f32 0.0, %v127
    %129 = vmatmul.f32.gmra.mxu0 %v79
    %v130 = vpop.f32.mrf.mxu0
    %v131 = vadd.f32 0.0, %v130
    %132 = vmatmul.f32.gmra.mxu0 %v80
    %v133 = vpop.f32.mrf.mxu0
    %v134 = vadd.f32 0.0, %v133
    %135 = vmatmul.f32.gmra.mxu0 %v81
    %v136 = vpop.f32.mrf.mxu0
    %v137 = vadd.f32 0.0, %v136
    %138 = vdwg.mxu0
    %v139 = vld [vmem:[#allocation2] sm:$0xff]
    %v140 = vld [vmem:[#allocation3] sm:$0xff]
    %v141 = vmul.f32 %v139, 0.95
    %v142 = vadd.f32 %v141, %v116
    %vm143 = vcmp.gt.f32.partialorder %v139, 1.0
    %v144 = vsel %vm143, 1.0, 0.0
    %v145 = vsub.f32 %v142, %v144
    %vm146 = vcmp.gt.f32.partialorder %v145, 1.0
    %v147 = vsel %vm146, 1.0, 0.0
    %v148 = vadd.f32 %v140, %v147
    %v149 = vmul.f32 %v145, 0.95
    %v150 = vadd.f32 %v149, %v119
    %v151 = vsub.f32 %v150, %v147
    %vm152 = vcmp.gt.f32.partialorder %v151, 1.0
    %v153 = vsel %vm152, 1.0, 0.0
    %v154 = vadd.f32 %v148, %v153
    %v155 = vmul.f32 %v151, 0.95
    %v156 = vadd.f32 %v155, %v122
    %v157 = vsub.f32 %v156, %v153
    %vm158 = vcmp.gt.f32.partialorder %v157, 1.0
    %v159 = vsel %vm158, 1.0, 0.0
    %v160 = vadd.f32 %v154, %v159
    %v161 = vmul.f32 %v157, 0.95
    %v162 = vadd.f32 %v161, %v125
    %v163 = vsub.f32 %v162, %v159
    %vm164 = vcmp.gt.f32.partialorder %v163, 1.0
    %v165 = vsel %vm164, 1.0, 0.0
    %v166 = vadd.f32 %v160, %v165
    %v167 = vmul.f32 %v163, 0.95
    %v168 = vadd.f32 %v167, %v128
    %v169 = vsub.f32 %v168, %v165
    %vm170 = vcmp.gt.f32.partialorder %v169, 1.0
    %v171 = vsel %vm170, 1.0, 0.0
    %v172 = vadd.f32 %v166, %v171
    %v173 = vmul.f32 %v169, 0.95
    %v174 = vadd.f32 %v173, %v131
    %v175 = vsub.f32 %v174, %v171
    %vm176 = vcmp.gt.f32.partialorder %v175, 1.0
    %v177 = vsel %vm176, 1.0, 0.0
    %v178 = vadd.f32 %v172, %v177
    %v179 = vmul.f32 %v175, 0.95
    %v180 = vadd.f32 %v179, %v134
    %v181 = vsub.f32 %v180, %v177
    %vm182 = vcmp.gt.f32.partialorder %v181, 1.0
    %v183 = vsel %vm182, 1.0, 0.0
    %v184 = vadd.f32 %v178, %v183
    %v185 = vmul.f32 %v181, 0.95
    %v186 = vadd.f32 %v185, %v137
    %v187 = vsub.f32 %v186, %v183
    %vm188 = vcmp.gt.f32.partialorder %v187, 1.0
    %v189 = vsel %vm188, 1.0, 0.0
    %v190 = vadd.f32 %v184, %v189
    %191 = vst [vmem:[#allocation2] sm:$0xff] %v187
    %192 = vst [vmem:[#allocation3] sm:$0xff] %v190
    // Predicated region
    $region38: #{tpu_custom_call.1} parent=1 // pred_check
      %p193 = pneg %p68
    $region39: #{tpu_custom_call.1} parent=1 // pred_check_branch
      %195 = sbr.rel (%p193) target = $region41
    $region40: #{tpu_custom_call.1} parent=1 // pred_region
      %v196 = vld [vmem:[#allocation3] sm:$0xff]
      %v197 = vld [vmem:[#allocation9] sm:$0xff]
      %v198 = vld [vmem:[#allocation9 + $0x8] sm:$0xff]
      %v199 = vld [vmem:[#allocation9 + $0x10] sm:$0xff]
      %v200 = vld [vmem:[#allocation9 + $0x18] sm:$0xff]
      %v201 = vld [vmem:[#allocation9 + $0x20] sm:$0xff]
      %v202 = vld [vmem:[#allocation9 + $0x28] sm:$0xff]
      %v203 = vld [vmem:[#allocation9 + $0x30] sm:$0xff]
      %v204 = vld [vmem:[#allocation9 + $0x38] sm:$0xff]
      %v205 = vld [vmem:[#allocation9 + $0x40] sm:$0xff]
      %v206 = vld [vmem:[#allocation9 + $0x48] sm:$0xff]
      %v207 = vld [vmem:[#allocation9 + $0x50] sm:$0xff]
      %v208 = vld [vmem:[#allocation9 + $0x58] sm:$0xff]
      %v209 = vld [vmem:[#allocation9 + $0x60] sm:$0xff]
      %v210 = vld [vmem:[#allocation9 + $0x68] sm:$0xff]
      %v211 = vld [vmem:[#allocation9 + $0x70] sm:$0xff]
      %v212 = vld [vmem:[#allocation9 + $0x78] sm:$0xff]
      %v213 = vld [vmem:[%s4] sm:$0x1]
      %v214 = vmul.f32 %v213, 8.0
      %v216 = vperm.slane %v214, 0
      %218 = vmatpush.msra.mxu0 %v212
      %219 = vmatpush.msra.mxu0 %v211
      %220 = vmatpush.msra.mxu0 %v210
      %221 = vmatpush.msra.mxu0 %v209
      %222 = vmatpush.msra.mxu0 %v208
      %223 = vmatpush.msra.mxu0 %v207
      %224 = vmatpush.msra.mxu0 %v206
      %225 = vmatpush.msra.mxu0 %v205
      %226 = vmatpush.msra.mxu0 %v204
      %227 = vmatpush.msra.mxu0 %v203
      %228 = vmatpush.msra.mxu0 %v202
      %229 = vmatpush.msra.mxu0 %v201
      %230 = vmatpush.msra.mxu0 %v200
      %231 = vmatpush.msra.mxu0 %v199
      %232 = vmatpush.msra.mxu0 %v198
      %233 = vmatpush.msra.mxu0 %v197
      %234 = vmatmul.f32.gmra.mxu0 %v196
      %v235 = vpop.f32.mrf.mxu0
      %v236 = vadd.f32 %v216, %v235
      %237 = vdwg.mxu0
      %238 = vst [vmem:[#allocation10] sm:$0xff] %v236
    $region41: #{tpu_custom_call.1} parent=1 // pred_fallthru
      _
    // Predicated region
    $region42: #{tpu_custom_call.1} parent=1 // pred_check
      _
    $region43: #{tpu_custom_call.1} parent=1 // pred_check_branch
      %240 = sbr.rel (0) target = $region45
    $region44: #{tpu_custom_call.1} parent=1 // pred_region
      %242 = vsyncadd [#allocation6], 0
      %s244 = sshll.u32 [#allocation10], 4
      %s245 = int_to_ptr.vmem [resolvable:$true] %s244
      %s246 = sshll.u32 %s5, 4
      %s247 = int_to_ptr.hbm [resolvable:$true] %s246
      %249 = dma.vmem_to_hbm [thread:$0]  %s245, 128, %s247, [#allocation6]
    $region45: #{tpu_custom_call.1} parent=1 // pred_fallthru
      _
    // Predicated region
    $region46: #{tpu_custom_call.1} parent=1 // pred_check
      _
    $region47: #{tpu_custom_call.1} parent=1 // pred_check_branch
      %251 = sbr.rel (0) target = $region49
    $region48: #{tpu_custom_call.1} parent=1 // pred_region
      %253 = dma.done [#allocation6], 128
    $region49: #{tpu_custom_call.1} parent=1 // pred_fallthru
      _
    %254 = vsyncpa [#allocation5], 1
    %255 = vsyncpa [#allocation8], 1
    %256 = vsyncpa [#allocation6], 1

// kernel: tpu_custom_call.1
$region0: #{tpu_custom_call.1}
  #allocation0 [shape = 'u32[]', space=smem, size = 0x4, offset = 0x4, fixed_abs, tag = 'smem constant byte address 0x4 - core index']
  #allocation1 [shape = 'u32[72,128]{1,0:T(1,128)}', space=vmem, size = 0x9000, scoped, tag = 'internal scratch']
  #allocation2 [shape = 'f32[8,128]{1,0:T(8,128)}', space=vmem, size = 0x1000, scoped, tag = 'scratch operand']
  #allocation3 [shape = 'f32[8,128]{1,0:T(8,128)}', space=vmem, size = 0x1000, scoped, tag = 'scratch operand']
  %s0 = inlined_call_operand.hbm [shape: f32[8,8,128], index: 0, kind: input, shape index: {}]
  %s1 = inlined_call_operand.hbm [shape: f32[128,128], index: 1, kind: input, shape index: {}]
  %s2 = inlined_call_operand.vmem [shape: f32[1,128], index: 2, kind: input, shape index: {}]
  %s3 = inlined_call_operand.hbm [shape: f32[128,128], index: 3, kind: input, shape index: {}]
  %s4 = inlined_call_operand.vmem [shape: f32[1,128], index: 4, kind: input, shape index: {}]
  %s5 = inlined_call_operand.hbm [shape: f32[8,128], index: 5, kind: output, shape index: {}]
  %s6 = sld [smem:[#allocation0]]
  $region50: #{tpu_custom_call.1} parent=0
    _
  %s8 = ssub.s32 1, %s6
  %s9 = scalar_select 0, %s8, %s6
  $region1: #{tpu_custom_call.1} parent=0
    #allocation4 [shape = 'u8[32768]{0}', space=vmem, size = 0x8000, scoped, tag = 'input window, operand 0, single buffered']
    #allocation5 [shape = 's32[1]{0}', space=sflag, size = 0x4, scoped, tag = 'scoped memory for tpu_custom_call.1']
    #allocation6 [shape = 's32[1]{0}', space=sflag, size = 0x4, scoped, tag = 'scoped memory for tpu_custom_call.1']
    #allocation7 [shape = 'u8[65536]{0}', space=vmem, size = 0x10000, scoped, tag = 'input window, operand 1, single buffered']
    #allocation8 [shape = 's32[1]{0}', space=sflag, size = 0x4, scoped, tag = 'scoped memory for tpu_custom_call.1']
    #allocation9 [shape = 'u8[65536]{0}', space=vmem, size = 0x10000, scoped, tag = 'input window, operand 3, single buffered']
    #allocation10 [shape = 'u8[4096]{0}', space=vmem, size = 0x1000, scoped, tag = 'output window, operand 0, single buffered']
    %10 = vsyncpa [#allocation5], 0
    %11 = vsyncpa [#allocation8], 0
    %12 = vsyncpa [#allocation6], 0
    // Predicated region
    $region2: #{tpu_custom_call.1} parent=1 // pred_check
      _
    $region3: #{tpu_custom_call.1} parent=1 // pred_check_branch
      %14 = sbr.rel (0) target = $region5
    $region4: #{tpu_custom_call.1} parent=1 // pred_region
      %16 = vsyncadd [#allocation5], 0
      %s17 = sshll.u32 %s0, 4
      %s18 = int_to_ptr.hbm [resolvable:$true] %s17
      %s19 = sshll.u32 [#allocation4], 4
      %s20 = int_to_ptr.vmem [resolvable:$true] %s19
      %25 = dma.hbm_to_vmem [thread:$0]  %s18, 1024, %s20, [#allocation5], 128, 128, 8
    $region5: #{tpu_custom_call.1} parent=1 // pred_fallthru
      _
    // Predicated region
    $region6: #{tpu_custom_call.1} parent=1 // pred_check
      _
    $region7: #{tpu_custom_call.1} parent=1 // pred_check_branch
      %27 = sbr.rel (0) target = $region9
    $region8: #{tpu_custom_call.1} parent=1 // pred_region
      %29 = vsyncadd [#allocation8], 0
      %s30 = sshll.u32 %s1, 4
      %s31 = int_to_ptr.hbm [resolvable:$true] %s30
      %s32 = sshll.u32 [#allocation7], 4
      %s33 = int_to_ptr.vmem [resolvable:$true] %s32
      %38 = dma.hbm_to_vmem [thread:$0]  %s31, 2048, %s33, [#allocation8], 128, 128, 8
    $region9: #{tpu_custom_call.1} parent=1 // pred_fallthru
      _
    // Predicated region
    $region10: #{tpu_custom_call.1} parent=1 // pred_check
      _
    $region11: #{tpu_custom_call.1} parent=1 // pred_check_branch
      %40 = sbr.rel (0) target = $region13
    $region12: #{tpu_custom_call.1} parent=1 // pred_region
      _
    $region13: #{tpu_custom_call.1} parent=1 // pred_fallthru
      _
    // Predicated region
    $region14: #{tpu_custom_call.1} parent=1 // pred_check
      _
    $region15: #{tpu_custom_call.1} parent=1 // pred_check_branch
      %42 = sbr.rel (0) target = $region17
    $region16: #{tpu_custom_call.1} parent=1 // pred_region
      %44 = vsyncadd [#allocation8], 0
      %s45 = sshll.u32 %s3, 4
      %s46 = int_to_ptr.hbm [resolvable:$true] %s45
      %s47 = sshll.u32 [#allocation9], 4
      %s48 = int_to_ptr.vmem [resolvable:$true] %s47
      %53 = dma.hbm_to_vmem [thread:$0]  %s46, 2048, %s48, [#allocation8], 128, 128, 8
    $region17: #{tpu_custom_call.1} parent=1 // pred_fallthru
      _
    // Predicated region
    $region18: #{tpu_custom_call.1} parent=1 // pred_check
      _
    $region19: #{tpu_custom_call.1} parent=1 // pred_check_branch
      %55 = sbr.rel (0) target = $region21
    $region20: #{tpu_custom_call.1} parent=1 // pred_region
      _
    $region21: #{tpu_custom_call.1} parent=1 // pred_fallthru
      _
    // Predicated region
    $region22: #{tpu_custom_call.1} parent=1 // pred_check
      _
    $region23: #{tpu_custom_call.1} parent=1 // pred_check_branch
      %57 = sbr.rel (0) target = $region25
    $region24: #{tpu_custom_call.1} parent=1 // pred_region
      %59 = dma.done [#allocation5], 1024
    $region25: #{tpu_custom_call.1} parent=1 // pred_fallthru
      _
    // Predicated region
    $region26: #{tpu_custom_call.1} parent=1 // pred_check
      _
    $region27: #{tpu_custom_call.1} parent=1 // pred_check_branch
      %61 = sbr.rel (0) target = $region29
    $region28: #{tpu_custom_call.1} parent=1 // pred_region
      %63 = dma.done [#allocation8], 2048
    $region29: #{tpu_custom_call.1} parent=1 // pred_fallthru
      _
    // Predicated region
    $region30: #{tpu_custom_call.1} parent=1 // pred_check
      _
    $region31: #{tpu_custom_call.1} parent=1 // pred_check_branch
      %65 = sbr.rel (0) target = $region33
    $region32: #{tpu_custom_call.1} parent=1 // pred_region
      %67 = dma.done [#allocation8], 2048
    $region33: #{tpu_custom_call.1} parent=1 // pred_fallthru
      _
    %p68 = scmp.eq.s32.totalorder 0, 0
    // Predicated region
    $region34: #{tpu_custom_call.1} parent=1 // pred_check
      %p69 = pneg %p68
    $region35: #{tpu_custom_call.1} parent=1 // pred_check_branch
      %71 = sbr.rel (%p69) target = $region37
    $region36: #{tpu_custom_call.1} parent=1 // pred_region
      %72 = vst [vmem:[#allocation2] sm:$0xff] 0.0
      %73 = vst [vmem:[#allocation3] sm:$0xff] 0.0
    $region37: #{tpu_custom_call.1} parent=1 // pred_fallthru
      _
    %v74 = vld [vmem:[#allocation4] sm:$0xff]
    %v75 = vld [vmem:[#allocation4 + $0x8] sm:$0xff]
    %v76 = vld [vmem:[#allocation4 + $0x10] sm:$0xff]
    %v77 = vld [vmem:[#allocation4 + $0x18] sm:$0xff]
    %v78 = vld [vmem:[#allocation4 + $0x20] sm:$0xff]
    %v79 = vld [vmem:[#allocation4 + $0x28] sm:$0xff]
    %v80 = vld [vmem:[#allocation4 + $0x30] sm:$0xff]
    %v81 = vld [vmem:[#allocation4 + $0x38] sm:$0xff]
    %v82 = vld [vmem:[#allocation7] sm:$0xff]
    %v83 = vld [vmem:[#allocation7 + $0x8] sm:$0xff]
    %v84 = vld [vmem:[#allocation7 + $0x10] sm:$0xff]
    %v85 = vld [vmem:[#allocation7 + $0x18] sm:$0xff]
    %v86 = vld [vmem:[#allocation7 + $0x20] sm:$0xff]
    %v87 = vld [vmem:[#allocation7 + $0x28] sm:$0xff]
    %v88 = vld [vmem:[#allocation7 + $0x30] sm:$0xff]
    %v89 = vld [vmem:[#allocation7 + $0x38] sm:$0xff]
    %v90 = vld [vmem:[#allocation7 + $0x40] sm:$0xff]
    %v91 = vld [vmem:[#allocation7 + $0x48] sm:$0xff]
    %v92 = vld [vmem:[#allocation7 + $0x50] sm:$0xff]
    %v93 = vld [vmem:[#allocation7 + $0x58] sm:$0xff]
    %v94 = vld [vmem:[#allocation7 + $0x60] sm:$0xff]
    %v95 = vld [vmem:[#allocation7 + $0x68] sm:$0xff]
    %v96 = vld [vmem:[#allocation7 + $0x70] sm:$0xff]
    %v97 = vld [vmem:[#allocation7 + $0x78] sm:$0xff]
    %98 = vmatpush.msra.mxu0 %v97
    %99 = vmatpush.msra.mxu0 %v96
    %100 = vmatpush.msra.mxu0 %v95
    %101 = vmatpush.msra.mxu0 %v94
    %102 = vmatpush.msra.mxu0 %v93
    %103 = vmatpush.msra.mxu0 %v92
    %104 = vmatpush.msra.mxu0 %v91
    %105 = vmatpush.msra.mxu0 %v90
    %106 = vmatpush.msra.mxu0 %v89
    %107 = vmatpush.msra.mxu0 %v88
    %108 = vmatpush.msra.mxu0 %v87
    %109 = vmatpush.msra.mxu0 %v86
    %110 = vmatpush.msra.mxu0 %v85
    %111 = vmatpush.msra.mxu0 %v84
    %112 = vmatpush.msra.mxu0 %v83
    %113 = vmatpush.msra.mxu0 %v82
    %114 = vmatmul.f32.gmra.mxu0 %v74
    %v115 = vpop.f32.mrf.mxu0
    %v116 = vadd.f32 0.0, %v115
    %117 = vmatmul.f32.gmra.mxu0 %v75
    %v118 = vpop.f32.mrf.mxu0
    %v119 = vadd.f32 0.0, %v118
    %120 = vmatmul.f32.gmra.mxu0 %v76
    %v121 = vpop.f32.mrf.mxu0
    %v122 = vadd.f32 0.0, %v121
    %123 = vmatmul.f32.gmra.mxu0 %v77
    %v124 = vpop.f32.mrf.mxu0
    %v125 = vadd.f32 0.0, %v124
    %126 = vmatmul.f32.gmra.mxu0 %v78
    %v127 = vpop.f32.mrf.mxu0
    %v128 = vadd.f32 0.0, %v127
    %129 = vmatmul.f32.gmra.mxu0 %v79
    %v130 = vpop.f32.mrf.mxu0
    %v131 = vadd.f32 0.0, %v130
    %132 = vmatmul.f32.gmra.mxu0 %v80
    %v133 = vpop.f32.mrf.mxu0
    %v134 = vadd.f32 0.0, %v133
    %135 = vmatmul.f32.gmra.mxu0 %v81
    %v136 = vpop.f32.mrf.mxu0
    %v137 = vadd.f32 0.0, %v136
    %138 = vdwg.mxu0
    %v139 = vld [vmem:[#allocation2] sm:$0xff]
    %v140 = vld [vmem:[#allocation3] sm:$0xff]
    %v141 = vmul.f32 %v139, 0.95
    %v142 = vadd.f32 %v141, %v116
    %vm143 = vcmp.gt.f32.partialorder %v139, 1.0
    %v144 = vsel %vm143, 1.0, 0.0
    %v145 = vsub.f32 %v142, %v144
    %vm146 = vcmp.gt.f32.partialorder %v145, 1.0
    %v147 = vsel %vm146, 1.0, 0.0
    %v148 = vadd.f32 %v140, %v147
    %v149 = vmul.f32 %v145, 0.95
    %v150 = vadd.f32 %v149, %v119
    %v151 = vsub.f32 %v150, %v147
    %vm152 = vcmp.gt.f32.partialorder %v151, 1.0
    %v153 = vsel %vm152, 1.0, 0.0
    %v154 = vadd.f32 %v148, %v153
    %v155 = vmul.f32 %v151, 0.95
    %v156 = vadd.f32 %v155, %v122
    %v157 = vsub.f32 %v156, %v153
    %vm158 = vcmp.gt.f32.partialorder %v157, 1.0
    %v159 = vsel %vm158, 1.0, 0.0
    %v160 = vadd.f32 %v154, %v159
    %v161 = vmul.f32 %v157, 0.95
    %v162 = vadd.f32 %v161, %v125
    %v163 = vsub.f32 %v162, %v159
    %vm164 = vcmp.gt.f32.partialorder %v163, 1.0
    %v165 = vsel %vm164, 1.0, 0.0
    %v166 = vadd.f32 %v160, %v165
    %v167 = vmul.f32 %v163, 0.95
    %v168 = vadd.f32 %v167, %v128
    %v169 = vsub.f32 %v168, %v165
    %vm170 = vcmp.gt.f32.partialorder %v169, 1.0
    %v171 = vsel %vm170, 1.0, 0.0
    %v172 = vadd.f32 %v166, %v171
    %v173 = vmul.f32 %v169, 0.95
    %v174 = vadd.f32 %v173, %v131
    %v175 = vsub.f32 %v174, %v171
    %vm176 = vcmp.gt.f32.partialorder %v175, 1.0
    %v177 = vsel %vm176, 1.0, 0.0
    %v178 = vadd.f32 %v172, %v177
    %v179 = vmul.f32 %v175, 0.95
    %v180 = vadd.f32 %v179, %v134
    %v181 = vsub.f32 %v180, %v177
    %vm182 = vcmp.gt.f32.partialorder %v181, 1.0
    %v183 = vsel %vm182, 1.0, 0.0
    %v184 = vadd.f32 %v178, %v183
    %v185 = vmul.f32 %v181, 0.95
    %v186 = vadd.f32 %v185, %v137
    %v187 = vsub.f32 %v186, %v183
    %vm188 = vcmp.gt.f32.partialorder %v187, 1.0
    %v189 = vsel %vm188, 1.0, 0.0
    %v190 = vadd.f32 %v184, %v189
    %191 = vst [vmem:[#allocation2] sm:$0xff] %v187
    %192 = vst [vmem:[#allocation3] sm:$0xff] %v190
    // Predicated region
    $region38: #{tpu_custom_call.1} parent=1 // pred_check
      %p193 = pneg %p68
    $region39: #{tpu_custom_call.1} parent=1 // pred_check_branch
      %195 = sbr.rel (%p193) target = $region41
    $region40: #{tpu_custom_call.1} parent=1 // pred_region
      %v196 = vld [vmem:[#allocation3] sm:$0xff]
      %v197 = vld [vmem:[#allocation9] sm:$0xff]
      %v198 = vld [vmem:[#allocation9 + $0x8] sm:$0xff]
      %v199 = vld [vmem:[#allocation9 + $0x10] sm:$0xff]
      %v200 = vld [vmem:[#allocation9 + $0x18] sm:$0xff]
      %v201 = vld [vmem:[#allocation9 + $0x20] sm:$0xff]
      %v202 = vld [vmem:[#allocation9 + $0x28] sm:$0xff]
      %v203 = vld [vmem:[#allocation9 + $0x30] sm:$0xff]
      %v204 = vld [vmem:[#allocation9 + $0x38] sm:$0xff]
      %v205 = vld [vmem:[#allocation9 + $0x40] sm:$0xff]
      %v206 = vld [vmem:[#allocation9 + $0x48] sm:$0xff]
      %v207 = vld [vmem:[#allocation9 + $0x50] sm:$0xff]
      %v208 = vld [vmem:[#allocation9 + $0x58] sm:$0xff]
      %v209 = vld [vmem:[#allocation9 + $0x60] sm:$0xff]
      %v210 = vld [vmem:[#allocation9 + $0x68] sm:$0xff]
      %v211 = vld [vmem:[#allocation9 + $0x70] sm:$0xff]
      %v212 = vld [vmem:[#allocation9 + $0x78] sm:$0xff]
      %v213 = vld [vmem:[%s4] sm:$0x1]
      %v214 = vmul.f32 %v213, 8.0
      %v216 = vperm.slane %v214, 0
      %218 = vmatpush.msra.mxu0 %v212
      %219 = vmatpush.msra.mxu0 %v211
      %220 = vmatpush.msra.mxu0 %v210
      %221 = vmatpush.msra.mxu0 %v209
      %222 = vmatpush.msra.mxu0 %v208
      %223 = vmatpush.msra.mxu0 %v207
      %224 = vmatpush.msra.mxu0 %v206
      %225 = vmatpush.msra.mxu0 %v205
      %226 = vmatpush.msra.mxu0 %v204
      %227 = vmatpush.msra.mxu0 %v203
      %228 = vmatpush.msra.mxu0 %v202
      %229 = vmatpush.msra.mxu0 %v201
      %230 = vmatpush.msra.mxu0 %v200
      %231 = vmatpush.msra.mxu0 %v199
      %232 = vmatpush.msra.mxu0 %v198
      %233 = vmatpush.msra.mxu0 %v197
      %234 = vmatmul.f32.gmra.mxu0 %v196
      %v235 = vpop.f32.mrf.mxu0
      %v236 = vadd.f32 %v216, %v235
      %237 = vdwg.mxu0
      %238 = vst [vmem:[#allocation10] sm:$0xff] %v236
    $region41: #{tpu_custom_call.1} parent=1 // pred_fallthru
      _
    // Predicated region
    $region42: #{tpu_custom_call.1} parent=1 // pred_check
      _
    $region43: #{tpu_custom_call.1} parent=1 // pred_check_branch
      %240 = sbr.rel (0) target = $region45
    $region44: #{tpu_custom_call.1} parent=1 // pred_region
      %242 = vsyncadd [#allocation6], 0
      %s244 = sshll.u32 [#allocation10], 4
      %s245 = int_to_ptr.vmem [resolvable:$true] %s244
      %s246 = sshll.u32 %s5, 4
      %s247 = int_to_ptr.hbm [resolvable:$true] %s246
      %249 = dma.vmem_to_hbm [thread:$0]  %s245, 128, %s247, [#allocation6]
    $region45: #{tpu_custom_call.1} parent=1 // pred_fallthru
      _
    // Predicated region
    $region46: #{tpu_custom_call.1} parent=1 // pred_check
      _
    $region47: #{tpu_custom_call.1} parent=1 // pred_check_branch
      %251 = sbr.rel (0) target = $region49
    $region48: #{tpu_custom_call.1} parent=1 // pred_region
      %253 = dma.done [#allocation6], 128
    $region49: #{tpu_custom_call.1} parent=1 // pred_fallthru
      _
    %254 = vsyncpa [#allocation5], 1
    %255 = vsyncpa [#allocation8], 1
    %256 = vsyncpa [#allocation6], 1

</llo_original>
